<compile_context>
chip_gen: v6e
topology: v6e:2x2x1
jax: 0.10.0
libtpu: 0.0.40
codegen_flags: <defaults>
</compile_context>

<pallas_src>
import numpy as np
import jax
import jax.numpy as jnp
from jax import lax
from jax.experimental import pallas as pl
from jax.experimental.pallas import tpu as pltpu

C0, C1, C2 = 256, 128, 64   # channel widths fixed by the PyTorch module
LANE = 128                  # lane-dense padding for the output channels


# ----------------------------- in-kernel helpers ------------------------------

def _shift_down(x):
    """y[m] = x[m-1] along axis 0, y[0] = 0 (sublane roll on the XLU + mask)."""
    rolled = pltpu.roll(x, shift=1, axis=0)
    row = lax.broadcasted_iota(jnp.int32, x.shape, 0)
    return jnp.where(row == 0, 0.0, rolled)


def _shift_up(x):
    """y[m] = x[m+1] along axis 0, y[L-1] = 0."""
    L = x.shape[0]
    rolled = pltpu.roll(x, shift=L - 1, axis=0)
    row = lax.broadcasted_iota(jnp.int32, x.shape, 0)
    return jnp.where(row == L - 1, 0.0, rolled)


def _taps(x_bf16, w_ref):
    """Four per-tap channel matmuls of ConvTranspose1d(k=4) in (L, C) layout."""
    return [jnp.dot(x_bf16, w_ref[k], preferred_element_type=jnp.float32)
            for k in range(4)]


# ----------------------------- Pallas kernel ----------------------------------
# ConvTranspose1d(k=4, s=2, p=1) on a length-N input u (length-major (N, C)):
#   out[2n]   = u[n]   @ W[1] + u[n-1] @ W[3] + b
#   out[2n+1] = u[n+1] @ W[0] + u[n]   @ W[2] + b        (u[-1] = u[N] = 0)
# Carrying phases: y1 -> (A1, B1); y2 -> (P0..P3); y3 -> 8 output phases.

def ecg_generator_kernel(x0_ref, w1_ref, b1_ref, w2_ref, b2_ref,
                         wq_ref, bq_ref, wk_ref, bk_ref, wv_ref, bv_ref,
                         gamma_ref, w3_ref, b3_ref, out_ref):
    f32 = jnp.float32
    bf16 = jnp.bfloat16
    L0 = x0_ref.shape[1]

    # ---- conv1 (256 -> 128) + ReLU : 2 output phases -------------------------
    x0b = x0_ref[0, :, :].astype(bf16)                       # (L0, C0)
    t = _taps(x0b, w1_ref)                                   # 4 x (L0, C1) f32
    b1 = b1_ref[...]
    A1 = jnp.maximum(t[1] + _shift_down(t[3]) + b1, 0.0)     # y1[2m]
    B1 = jnp.maximum(_shift_up(t[0]) + t[2] + b1, 0.0)       # y1[2m+1]

    # ---- conv2 (128 -> 64) + ReLU : 4 output phases, stacked taps -------------
    AB = jnp.concatenate([A1, B1], axis=0).astype(bf16)      # (2*L0, C1)
    u = _taps(AB, w2_ref)                                    # 4 x (2*L0, C2) f32
    at = [uk[:L0, :] for uk in u]
    bt = [uk[L0:, :] for uk in u]
    b2 = b2_ref[...]
    P0 = jnp.maximum(at[1] + _shift_down(bt[3]) + b2, 0.0)   # y2[4m]
    P1 = jnp.maximum(bt[0] + at[2] + b2, 0.0)                # y2[4m+1]
    P2 = jnp.maximum(bt[1] + at[3] + b2, 0.0)                # y2[4m+2]
    P3 = jnp.maximum(_shift_up(at[0]) + bt[2] + b2, 0.0)     # y2[4m+3]

    # ---- SelfAttention1D on the phase-major (permuted) sequence --------------
    # softmax-attention is equivariant to a permutation of positions, so it can
    # be evaluated directly in phase order; the residual keeps the same order.
    S = jnp.concatenate([P0, P1, P2, P3], axis=0)            # (W=4*L0, C2) f32
    Sb = S.astype(bf16)
    q = jnp.dot(Sb, wq_ref[...], preferred_element_type=f32) + bq_ref[...]
    k = jnp.dot(Sb, wk_ref[...], preferred_element_type=f32) + bk_ref[...]
    v = jnp.dot(Sb, wv_ref[...], preferred_element_type=f32) + bv_ref[...]
    energy = lax.dot_general(q, k, (((1,), (1,)), ((), ())),
                             preferred_element_type=f32)     # (W, W)
    p = jnp.exp(energy - jnp.max(energy, axis=-1, keepdims=True))
    denom = jnp.sum(p, axis=-1, keepdims=True)
    att = jnp.dot(p.astype(bf16), v.astype(bf16), preferred_element_type=f32)
    att = att * pl.reciprocal(denom, approx=True)            # (W, C2)
    a_seq = gamma_ref[0, 0] * att + S                        # residual, phase-major

    # ---- conv3 (64 -> padded 128) + tanh : stacked phases, 4 matmuls ----------
    # In phase-major order, the interleaved neighbors u[n-1] / u[n+1] are the
    # phase blocks rotated by one phase (with a sublane shift on the wrap block).
    prev = jnp.concatenate([_shift_down(a_seq[3 * L0:, :]), a_seq[:3 * L0, :]],
                           axis=0)                           # u[n-1], phase-major
    nxt = jnp.concatenate([a_seq[L0:, :], _shift_up(a_seq[:L0, :])],
                          axis=0)                            # u[n+1], phase-major
    Rb, prevb, nxtb = a_seq.astype(bf16), prev.astype(bf16), nxt.astype(bf16)
    b3 = b3_ref[...]
    even = jnp.tanh(jnp.dot(Rb, w3_ref[1], preferred_element_type=f32)
                    + jnp.dot(prevb, w3_ref[3], preferred_element_type=f32) + b3)
    odd = jnp.tanh(jnp.dot(nxtb, w3_ref[0], preferred_element_type=f32)
                   + jnp.dot(Rb, w3_ref[2], preferred_element_type=f32) + b3)
    # even[ph*L0+m] = y3[8m+2ph], odd[ph*L0+m] = y3[8m+2ph+1]; single lane-dense store.
    out_ref[0, :, :] = jnp.concatenate([even, odd], axis=1).astype(out_ref.dtype)


# ------------------------------- wrapper ---------------------------------------

def ecg_generator_forward(z, kparams, output_channels):
    (W_fc, b_fc, w1k, b1k, w2k, b2k, wqk, bqk, wkk, bkk, wvk, bvk,
     gamma2, w3k, b3k) = kparams
    B = z.shape[0]
    L0 = W_fc.shape[0] // C0
    cpad = w3k.shape[2]
    L3 = 8 * L0

    # fc1 + view(-1, 256, L0): one batched lane-dense GEMM in XLA, handed to the
    # kernel in length-major (B, L0, C0) layout.
    x0 = (z @ W_fc.T + b_fc).reshape(B, C0, L0).transpose(0, 2, 1)
    x0 = x0.astype(jnp.float32)

    def const_spec(a):                     # whole-array block, constant index map
        zeros = (0,) * a.ndim
        return pl.BlockSpec(a.shape, lambda b, _z=zeros: _z)

    in_specs = [
        pl.BlockSpec((1, L0, C0), lambda b: (b, 0, 0)),      # x0, per batch elem
        const_spec(w1k), const_spec(b1k),
        const_spec(w2k), const_spec(b2k),
        const_spec(wqk), const_spec(bqk),
        const_spec(wkk), const_spec(bkk),
        const_spec(wvk), const_spec(bvk),
        pl.BlockSpec((1, 1), lambda b: (0, 0),
                     memory_space=pltpu.MemorySpace.SMEM),   # gamma scalar
        const_spec(w3k), const_spec(b3k),
    ]

    out = pl.pallas_call(
        ecg_generator_kernel,
        out_shape=jax.ShapeDtypeStruct((B, 4 * L0, 2 * cpad), jnp.float32),
        grid=(B,),
        in_specs=in_specs,
        out_specs=pl.BlockSpec((1, 4 * L0, 2 * cpad), lambda b: (b, 0, 0)),
        compiler_params=pltpu.CompilerParams(
            dimension_semantics=("parallel",),               # batch is megacore-shardable
            vmem_limit_bytes=48 * 1024 * 1024),
    )(x0, w1k, b1k, w2k, b2k, wqk, bqk, wkk, bkk, wvk, bvk, gamma2, w3k, b3k)

    # out[b, ph*L0 + m, parity*cpad + c] == y[b, c, 8*m + 2*ph + parity].
    y = out.reshape(B, 4, L0, 2, cpad)
    y = jnp.transpose(y, (0, 4, 2, 1, 3)).reshape(B, cpad, L3)
    return y[:, :output_channels, :]                         # (B, Cout, L) == NCW


# ------------------------- parameter initialization ----------------------------

def init_params(key, latent_dim, base_length, output_channels):
    L0 = base_length
    ks = jax.random.split(key, 14)
    s = 0.05
    nrm = lambda k, shp: s * jax.random.normal(k, shp, dtype=jnp.float32)

    # PyTorch-layout parameters (same shapes as the nn.Module's __init__).
    W_fc = nrm(ks[0], (C0 * L0, latent_dim)); b_fc = nrm(ks[1], (C0 * L0,))
    w1 = nrm(ks[2], (C0, C1, 4)); b1 = nrm(ks[3], (C1,))
    w2 = nrm(ks[4], (C1, C2, 4)); b2 = nrm(ks[5], (C2,))
    wq = nrm(ks[6], (C2 // 8, C2, 1)); bq = nrm(ks[7], (C2 // 8,))
    wk = nrm(ks[8], (C2 // 8, C2, 1)); bk = nrm(ks[9], (C2 // 8,))
    wv = nrm(ks[10], (C2, C2, 1)); bv = nrm(ks[11], (C2,))
    # PyTorch inits gamma to 0; use a nonzero value so the attention branch
    # actually contributes in this synthetic check.
    gamma = jnp.array(0.5, dtype=jnp.float32)
    w3 = nrm(ks[12], (C2, output_channels, 4)); b3 = nrm(ks[13], (output_channels,))

    torch_params = dict(W_fc=W_fc, b_fc=b_fc, w1=w1, b1=b1, w2=w2, b2=b2,
                        wq=wq, bq=bq, wk=wk, bk=bk, wv=wv, bv=bv,
                        gamma=gamma, w3=w3, b3=b3)

    # Kernel-layout parameters: tap-major conv weights in bf16, biases f32,
    # conv3 zero-padded to a lane-dense channel count.
    bf16 = jnp.bfloat16
    cpad = ((output_channels + LANE - 1) // LANE) * LANE
    w3p = jnp.zeros((C2, cpad, 4), jnp.float32).at[:, :output_channels, :].set(w3)
    b3p = jnp.zeros((cpad,), jnp.float32).at[:output_channels].set(b3)

    kparams = (
        W_fc, b_fc,                                            # fc stays in XLA (f32)
        jnp.transpose(w1, (2, 0, 1)).astype(bf16), b1[None, :],
        jnp.transpose(w2, (2, 0, 1)).astype(bf16), b2[None, :],
        wq[:, :, 0].T.astype(bf16), bq[None, :],
        wk[:, :, 0].T.astype(bf16), bk[None, :],
        wv[:, :, 0].T.astype(bf16), bv[None, :],
        gamma.reshape(1, 1),
        jnp.transpose(w3p, (2, 0, 1)).astype(bf16), b3p[None, :],
    )
    return torch_params, kparams


# ----------------------- pure-numpy reference (PyTorch semantics) ---------------

def reference_forward(z, p):
    z = np.asarray(z, np.float32)
    W_fc = np.asarray(p["W_fc"]); b_fc = np.asarray(p["b_fc"])
    B = z.shape[0]
    L0 = W_fc.shape[0] // C0

    def convT(x, w, b):   # x: (B, Cin, L), w: (Cin, Cout, 4), b: (Cout,)
        Bb, Cin, L = x.shape
        Lout = 2 * L
        out = np.tile(b[None, :, None], (Bb, 1, Lout)).astype(np.float32)
        for t in range(L):
            for k in range(4):
                j = 2 * t - 1 + k
                if 0 <= j < Lout:
                    out[:, :, j] += np.einsum("bi,io->bo", x[:, :, t], w[:, :, k])
        return out

    h = z @ W_fc.T + b_fc
    x = h.reshape(B, C0, L0)
    x = np.maximum(convT(x, np.asarray(p["w1"]), np.asarray(p["b1"])), 0.0)
    x = np.maximum(convT(x, np.asarray(p["w2"]), np.asarray(p["b2"])), 0.0)

    wq = np.asarray(p["wq"])[:, :, 0]; bq = np.asarray(p["bq"])
    wk = np.asarray(p["wk"])[:, :, 0]; bk = np.asarray(p["bk"])
    wv = np.asarray(p["wv"])[:, :, 0]; bv = np.asarray(p["bv"])
    q = np.einsum("oc,bcw->bow", wq, x) + bq[None, :, None]
    kk = np.einsum("oc,bcw->bow", wk, x) + bk[None, :, None]
    v = np.einsum("oc,bcw->bow", wv, x) + bv[None, :, None]
    query = q.transpose(0, 2, 1)
    energy = np.einsum("bwc,bcu->bwu", query, kk)
    energy = energy - energy.max(axis=-1, keepdims=True)
    e = np.exp(energy)
    attn = e / e.sum(axis=-1, keepdims=True)
    att_out = np.einsum("bcj,bij->bci", v, attn)
    x = float(p["gamma"]) * att_out + x

    return np.tanh(convT(x, np.asarray(p["w3"]), np.asarray(p["b3"])))


# --------------------------------- main -----------------------------------------

if __name__ == "__main__":
    B = 2
    latent_dim = 16
    base_length = 8          # PyTorch module uses 125 (output length 1000); scaled down
    output_channels = 12

    key = jax.random.PRNGKey(0)
    kz, kp = jax.random.split(key)
    z = jax.random.normal(kz, (B, latent_dim), dtype=jnp.float32)

    torch_params, kparams = init_params(kp, latent_dim, base_length, output_channels)

    y = ecg_generator_forward(z, kparams, output_channels)
    y = jax.block_until_ready(y)

    y_ref = reference_forward(np.asarray(z), torch_params)
    assert y.shape == (B, output_channels, 8 * base_length), y.shape
    # bf16 MXU operands (f32 accumulation) -> slightly looser tolerance than pure f32.
    np.testing.assert_allclose(np.asarray(y), y_ref, rtol=2e-2, atol=2e-2)
    print("KERNEL_OK")
</pallas_src>

<mosaic_0001>
module attributes {stable_mosaic.version = 11 : i64} {
  func.func @ecg_generator_kernel(%arg0: i32, %arg1: memref<1x8x256xf32, #tpu.memory_space<vmem>>, %arg2: memref<4x256x128xbf16, #tpu.memory_space<vmem>>, %arg3: memref<1x128xf32, #tpu.memory_space<vmem>>, %arg4: memref<4x128x64xbf16, #tpu.memory_space<vmem>>, %arg5: memref<1x64xf32, #tpu.memory_space<vmem>>, %arg6: memref<64x8xbf16, #tpu.memory_space<vmem>>, %arg7: memref<1x8xf32, #tpu.memory_space<vmem>>, %arg8: memref<64x8xbf16, #tpu.memory_space<vmem>>, %arg9: memref<1x8xf32, #tpu.memory_space<vmem>>, %arg10: memref<64x64xbf16, #tpu.memory_space<vmem>>, %arg11: memref<1x64xf32, #tpu.memory_space<vmem>>, %arg12: memref<1x1xf32, #tpu.memory_space<smem>>, %arg13: memref<4x64x128xbf16, #tpu.memory_space<vmem>>, %arg14: memref<1x128xf32, #tpu.memory_space<vmem>>, %arg15: memref<1x32x256xf32, #tpu.memory_space<vmem>>) attributes {dimension_semantics = [#tpu.dimension_semantics<parallel>], iteration_bounds = array<i64: 2>, scalar_prefetch = 0 : i64, scratch_operands = 0 : i64, tpu.core_type = #tpu.core_type<tc>, window_params = [{transform_indices = @transform_0, window_bounds = array<i64: 1, 8, 256>}, {pipeline_mode = #tpu.pipeline_mode<synchronous>, transform_indices = @transform_1, window_bounds = array<i64: 4, 256, 128>}, {pipeline_mode = #tpu.pipeline_mode<synchronous>, transform_indices = @transform_2, window_bounds = array<i64: 1, 128>}, {pipeline_mode = #tpu.pipeline_mode<synchronous>, transform_indices = @transform_3, window_bounds = array<i64: 4, 128, 64>}, {pipeline_mode = #tpu.pipeline_mode<synchronous>, transform_indices = @transform_4, window_bounds = array<i64: 1, 64>}, {pipeline_mode = #tpu.pipeline_mode<synchronous>, transform_indices = @transform_5, window_bounds = array<i64: 64, 8>}, {pipeline_mode = #tpu.pipeline_mode<synchronous>, transform_indices = @transform_6, window_bounds = array<i64: 1, 8>}, {pipeline_mode = #tpu.pipeline_mode<synchronous>, transform_indices = @transform_7, window_bounds = array<i64: 64, 8>}, {pipeline_mode = #tpu.pipeline_mode<synchronous>, transform_indices = @transform_8, window_bounds = array<i64: 1, 8>}, {pipeline_mode = #tpu.pipeline_mode<synchronous>, transform_indices = @transform_9, window_bounds = array<i64: 64, 64>}, {pipeline_mode = #tpu.pipeline_mode<synchronous>, transform_indices = @transform_10, window_bounds = array<i64: 1, 64>}, {transform_indices = @transform_11, window_bounds = array<i64: 1, 1>}, {pipeline_mode = #tpu.pipeline_mode<synchronous>, transform_indices = @transform_12, window_bounds = array<i64: 4, 64, 128>}, {pipeline_mode = #tpu.pipeline_mode<synchronous>, transform_indices = @transform_13, window_bounds = array<i64: 1, 128>}, {transform_indices = @transform_14, window_bounds = array<i64: 1, 32, 256>}]} {
    %c0 = arith.constant 0 : index
    %c0_0 = arith.constant 0 : index
    %c0_1 = arith.constant 0 : index
    %0 = vector.load %arg1[%c0, %c0_0, %c0_1] : memref<1x8x256xf32, #tpu.memory_space<vmem>>, vector<1x8x256xf32>
    %1 = vector.shape_cast %0 : vector<1x8x256xf32> to vector<8x256xf32>
    %2 = arith.truncf %1 : vector<8x256xf32> to vector<8x256xbf16>
    %c0_2 = arith.constant 0 : index
    %c0_3 = arith.constant 0 : index
    %c0_4 = arith.constant 0 : index
    %3 = vector.load %arg2[%c0_2, %c0_3, %c0_4] : memref<4x256x128xbf16, #tpu.memory_space<vmem>>, vector<1x256x128xbf16>
    %4 = vector.shape_cast %3 : vector<1x256x128xbf16> to vector<256x128xbf16>
    %cst = arith.constant dense<0.000000e+00> : vector<8x128xf32>
    %5 = tpu.matmul %2, %4, %cst {dimension_numbers = #tpu.dot_dimension_numbers<[1], [0], [0], [1], [0, 0, 1, 1], [], []>} : vector<8x256xbf16>, vector<256x128xbf16>, vector<8x128xf32> -> vector<8x128xf32>
    %c1 = arith.constant 1 : index
    %c0_5 = arith.constant 0 : index
    %c0_6 = arith.constant 0 : index
    %6 = vector.load %arg2[%c1, %c0_5, %c0_6] : memref<4x256x128xbf16, #tpu.memory_space<vmem>>, vector<1x256x128xbf16>
    %7 = vector.shape_cast %6 : vector<1x256x128xbf16> to vector<256x128xbf16>
    %cst_7 = arith.constant dense<0.000000e+00> : vector<8x128xf32>
    %8 = tpu.matmul %2, %7, %cst_7 {dimension_numbers = #tpu.dot_dimension_numbers<[1], [0], [0], [1], [0, 0, 1, 1], [], []>} : vector<8x256xbf16>, vector<256x128xbf16>, vector<8x128xf32> -> vector<8x128xf32>
    %c2 = arith.constant 2 : index
    %c0_8 = arith.constant 0 : index
    %c0_9 = arith.constant 0 : index
    %9 = vector.load %arg2[%c2, %c0_8, %c0_9] : memref<4x256x128xbf16, #tpu.memory_space<vmem>>, vector<1x256x128xbf16>
    %10 = vector.shape_cast %9 : vector<1x256x128xbf16> to vector<256x128xbf16>
    %cst_10 = arith.constant dense<0.000000e+00> : vector<8x128xf32>
    %11 = tpu.matmul %2, %10, %cst_10 {dimension_numbers = #tpu.dot_dimension_numbers<[1], [0], [0], [1], [0, 0, 1, 1], [], []>} : vector<8x256xbf16>, vector<256x128xbf16>, vector<8x128xf32> -> vector<8x128xf32>
    %c3 = arith.constant 3 : index
    %c0_11 = arith.constant 0 : index
    %c0_12 = arith.constant 0 : index
    %12 = vector.load %arg2[%c3, %c0_11, %c0_12] : memref<4x256x128xbf16, #tpu.memory_space<vmem>>, vector<1x256x128xbf16>
    %13 = vector.shape_cast %12 : vector<1x256x128xbf16> to vector<256x128xbf16>
    %cst_13 = arith.constant dense<0.000000e+00> : vector<8x128xf32>
    %14 = tpu.matmul %2, %13, %cst_13 {dimension_numbers = #tpu.dot_dimension_numbers<[1], [0], [0], [1], [0, 0, 1, 1], [], []>} : vector<8x256xbf16>, vector<256x128xbf16>, vector<8x128xf32> -> vector<8x128xf32>
    %c0_14 = arith.constant 0 : index
    %c0_15 = arith.constant 0 : index
    %15 = vector.load %arg3[%c0_14, %c0_15] : memref<1x128xf32, #tpu.memory_space<vmem>>, vector<1x128xf32>
    %c1_i32 = arith.constant 1 : i32
    %16 = tpu.dynamic_rotate %14 by %c1_i32 dim 0 : vector<8x128xf32>, i32 -> vector<8x128xf32>
    %17 = tpu.iota {dimensions = array<i32: 0>} : vector<8x128xi32>
    %c0_i32 = arith.constant 0 : i32
    %18 = vector.broadcast %c0_i32 : i32 to vector<8x128xi32>
    %19 = arith.cmpi eq, %17, %18 : vector<8x128xi32>
    %cst_16 = arith.constant 0.000000e+00 : f32
    %20 = vector.broadcast %cst_16 : f32 to vector<8x128xf32>
    %21 = arith.select %19, %20, %16 : vector<8x128xi1>, vector<8x128xf32>
    %22 = arith.addf %8, %21 : vector<8x128xf32>
    %23 = vector.broadcast %15 : vector<1x128xf32> to vector<8x128xf32>
    %24 = arith.addf %22, %23 : vector<8x128xf32>
    %cst_17 = arith.constant 0.000000e+00 : f32
    %25 = vector.broadcast %cst_17 : f32 to vector<8x128xf32>
    %26 = arith.maximumf %24, %25 : vector<8x128xf32>
    %c7_i32 = arith.constant 7 : i32
    %27 = tpu.dynamic_rotate %5 by %c7_i32 dim 0 : vector<8x128xf32>, i32 -> vector<8x128xf32>
    %28 = tpu.iota {dimensions = array<i32: 0>} : vector<8x128xi32>
    %c7_i32_18 = arith.constant 7 : i32
    %29 = vector.broadcast %c7_i32_18 : i32 to vector<8x128xi32>
    %30 = arith.cmpi eq, %28, %29 : vector<8x128xi32>
    %cst_19 = arith.constant 0.000000e+00 : f32
    %31 = vector.broadcast %cst_19 : f32 to vector<8x128xf32>
    %32 = arith.select %30, %31, %27 : vector<8x128xi1>, vector<8x128xf32>
    %33 = arith.addf %32, %11 : vector<8x128xf32>
    %34 = vector.broadcast %15 : vector<1x128xf32> to vector<8x128xf32>
    %35 = arith.addf %33, %34 : vector<8x128xf32>
    %cst_20 = arith.constant 0.000000e+00 : f32
    %36 = vector.broadcast %cst_20 : f32 to vector<8x128xf32>
    %37 = arith.maximumf %35, %36 : vector<8x128xf32>
    %38 = tpu.concatenate %26, %37 in 0 : vector<8x128xf32>, vector<8x128xf32> -> vector<16x128xf32>
    %39 = arith.truncf %38 : vector<16x128xf32> to vector<16x128xbf16>
    %c0_21 = arith.constant 0 : index
    %c0_22 = arith.constant 0 : index
    %c0_23 = arith.constant 0 : index
    %40 = vector.load %arg4[%c0_21, %c0_22, %c0_23] : memref<4x128x64xbf16, #tpu.memory_space<vmem>>, vector<1x128x64xbf16>
    %41 = vector.shape_cast %40 : vector<1x128x64xbf16> to vector<128x64xbf16>
    %cst_24 = arith.constant dense<0.000000e+00> : vector<16x64xf32>
    %42 = tpu.matmul %39, %41, %cst_24 {dimension_numbers = #tpu.dot_dimension_numbers<[1], [0], [0], [1], [0, 0, 1, 1], [], []>} : vector<16x128xbf16>, vector<128x64xbf16>, vector<16x64xf32> -> vector<16x64xf32>
    %c1_25 = arith.constant 1 : index
    %c0_26 = arith.constant 0 : index
    %c0_27 = arith.constant 0 : index
    %43 = vector.load %arg4[%c1_25, %c0_26, %c0_27] : memref<4x128x64xbf16, #tpu.memory_space<vmem>>, vector<1x128x64xbf16>
    %44 = vector.shape_cast %43 : vector<1x128x64xbf16> to vector<128x64xbf16>
    %cst_28 = arith.constant dense<0.000000e+00> : vector<16x64xf32>
    %45 = tpu.matmul %39, %44, %cst_28 {dimension_numbers = #tpu.dot_dimension_numbers<[1], [0], [0], [1], [0, 0, 1, 1], [], []>} : vector<16x128xbf16>, vector<128x64xbf16>, vector<16x64xf32> -> vector<16x64xf32>
    %c2_29 = arith.constant 2 : index
    %c0_30 = arith.constant 0 : index
    %c0_31 = arith.constant 0 : index
    %46 = vector.load %arg4[%c2_29, %c0_30, %c0_31] : memref<4x128x64xbf16, #tpu.memory_space<vmem>>, vector<1x128x64xbf16>
    %47 = vector.shape_cast %46 : vector<1x128x64xbf16> to vector<128x64xbf16>
    %cst_32 = arith.constant dense<0.000000e+00> : vector<16x64xf32>
    %48 = tpu.matmul %39, %47, %cst_32 {dimension_numbers = #tpu.dot_dimension_numbers<[1], [0], [0], [1], [0, 0, 1, 1], [], []>} : vector<16x128xbf16>, vector<128x64xbf16>, vector<16x64xf32> -> vector<16x64xf32>
    %c3_33 = arith.constant 3 : index
    %c0_34 = arith.constant 0 : index
    %c0_35 = arith.constant 0 : index
    %49 = vector.load %arg4[%c3_33, %c0_34, %c0_35] : memref<4x128x64xbf16, #tpu.memory_space<vmem>>, vector<1x128x64xbf16>
    %50 = vector.shape_cast %49 : vector<1x128x64xbf16> to vector<128x64xbf16>
    %cst_36 = arith.constant dense<0.000000e+00> : vector<16x64xf32>
    %51 = tpu.matmul %39, %50, %cst_36 {dimension_numbers = #tpu.dot_dimension_numbers<[1], [0], [0], [1], [0, 0, 1, 1], [], []>} : vector<16x128xbf16>, vector<128x64xbf16>, vector<16x64xf32> -> vector<16x64xf32>
    %52 = vector.extract_strided_slice %42 {offsets = [0, 0], sizes = [8, 64], strides = [1, 1]} : vector<16x64xf32> to vector<8x64xf32>
    %53 = vector.extract_strided_slice %45 {offsets = [0, 0], sizes = [8, 64], strides = [1, 1]} : vector<16x64xf32> to vector<8x64xf32>
    %54 = vector.extract_strided_slice %48 {offsets = [0, 0], sizes = [8, 64], strides = [1, 1]} : vector<16x64xf32> to vector<8x64xf32>
    %55 = vector.extract_strided_slice %51 {offsets = [0, 0], sizes = [8, 64], strides = [1, 1]} : vector<16x64xf32> to vector<8x64xf32>
    %56 = vector.extract_strided_slice %42 {offsets = [8, 0], sizes = [8, 64], strides = [1, 1]} : vector<16x64xf32> to vector<8x64xf32>
    %57 = vector.extract_strided_slice %45 {offsets = [8, 0], sizes = [8, 64], strides = [1, 1]} : vector<16x64xf32> to vector<8x64xf32>
    %58 = vector.extract_strided_slice %48 {offsets = [8, 0], sizes = [8, 64], strides = [1, 1]} : vector<16x64xf32> to vector<8x64xf32>
    %59 = vector.extract_strided_slice %51 {offsets = [8, 0], sizes = [8, 64], strides = [1, 1]} : vector<16x64xf32> to vector<8x64xf32>
    %c0_37 = arith.constant 0 : index
    %c0_38 = arith.constant 0 : index
    %60 = vector.load %arg5[%c0_37, %c0_38] : memref<1x64xf32, #tpu.memory_space<vmem>>, vector<1x64xf32>
    %c1_i32_39 = arith.constant 1 : i32
    %61 = tpu.dynamic_rotate %59 by %c1_i32_39 dim 0 : vector<8x64xf32>, i32 -> vector<8x64xf32>
    %62 = tpu.iota {dimensions = array<i32: 0>} : vector<8x64xi32>
    %c0_i32_40 = arith.constant 0 : i32
    %63 = vector.broadcast %c0_i32_40 : i32 to vector<8x64xi32>
    %64 = arith.cmpi eq, %62, %63 : vector<8x64xi32>
    %cst_41 = arith.constant 0.000000e+00 : f32
    %65 = vector.broadcast %cst_41 : f32 to vector<8x64xf32>
    %66 = arith.select %64, %65, %61 : vector<8x64xi1>, vector<8x64xf32>
    %67 = arith.addf %53, %66 : vector<8x64xf32>
    %68 = vector.broadcast %60 : vector<1x64xf32> to vector<8x64xf32>
    %69 = arith.addf %67, %68 : vector<8x64xf32>
    %cst_42 = arith.constant 0.000000e+00 : f32
    %70 = vector.broadcast %cst_42 : f32 to vector<8x64xf32>
    %71 = arith.maximumf %69, %70 : vector<8x64xf32>
    %72 = arith.addf %56, %54 : vector<8x64xf32>
    %73 = vector.broadcast %60 : vector<1x64xf32> to vector<8x64xf32>
    %74 = arith.addf %72, %73 : vector<8x64xf32>
    %cst_43 = arith.constant 0.000000e+00 : f32
    %75 = vector.broadcast %cst_43 : f32 to vector<8x64xf32>
    %76 = arith.maximumf %74, %75 : vector<8x64xf32>
    %77 = arith.addf %57, %55 : vector<8x64xf32>
    %78 = vector.broadcast %60 : vector<1x64xf32> to vector<8x64xf32>
    %79 = arith.addf %77, %78 : vector<8x64xf32>
    %cst_44 = arith.constant 0.000000e+00 : f32
    %80 = vector.broadcast %cst_44 : f32 to vector<8x64xf32>
    %81 = arith.maximumf %79, %80 : vector<8x64xf32>
    %c7_i32_45 = arith.constant 7 : i32
    %82 = tpu.dynamic_rotate %52 by %c7_i32_45 dim 0 : vector<8x64xf32>, i32 -> vector<8x64xf32>
    %83 = tpu.iota {dimensions = array<i32: 0>} : vector<8x64xi32>
    %c7_i32_46 = arith.constant 7 : i32
    %84 = vector.broadcast %c7_i32_46 : i32 to vector<8x64xi32>
    %85 = arith.cmpi eq, %83, %84 : vector<8x64xi32>
    %cst_47 = arith.constant 0.000000e+00 : f32
    %86 = vector.broadcast %cst_47 : f32 to vector<8x64xf32>
    %87 = arith.select %85, %86, %82 : vector<8x64xi1>, vector<8x64xf32>
    %88 = arith.addf %87, %58 : vector<8x64xf32>
    %89 = vector.broadcast %60 : vector<1x64xf32> to vector<8x64xf32>
    %90 = arith.addf %88, %89 : vector<8x64xf32>
    %cst_48 = arith.constant 0.000000e+00 : f32
    %91 = vector.broadcast %cst_48 : f32 to vector<8x64xf32>
    %92 = arith.maximumf %90, %91 : vector<8x64xf32>
    %93 = tpu.concatenate %71, %76, %81, %92 in 0 : vector<8x64xf32>, vector<8x64xf32>, vector<8x64xf32>, vector<8x64xf32> -> vector<32x64xf32>
    %94 = arith.truncf %93 : vector<32x64xf32> to vector<32x64xbf16>
    %c0_49 = arith.constant 0 : index
    %c0_50 = arith.constant 0 : index
    %95 = vector.load %arg6[%c0_49, %c0_50] : memref<64x8xbf16, #tpu.memory_space<vmem>>, vector<64x8xbf16>
    %cst_51 = arith.constant dense<0.000000e+00> : vector<32x8xf32>
    %96 = tpu.matmul %94, %95, %cst_51 {dimension_numbers = #tpu.dot_dimension_numbers<[1], [0], [0], [1], [0, 0, 1, 1], [], []>} : vector<32x64xbf16>, vector<64x8xbf16>, vector<32x8xf32> -> vector<32x8xf32>
    %c0_52 = arith.constant 0 : index
    %c0_53 = arith.constant 0 : index
    %97 = vector.load %arg7[%c0_52, %c0_53] : memref<1x8xf32, #tpu.memory_space<vmem>>, vector<1x8xf32>
    %98 = vector.broadcast %97 : vector<1x8xf32> to vector<32x8xf32>
    %99 = arith.addf %96, %98 : vector<32x8xf32>
    %c0_54 = arith.constant 0 : index
    %c0_55 = arith.constant 0 : index
    %100 = vector.load %arg8[%c0_54, %c0_55] : memref<64x8xbf16, #tpu.memory_space<vmem>>, vector<64x8xbf16>
    %cst_56 = arith.constant dense<0.000000e+00> : vector<32x8xf32>
    %101 = tpu.matmul %94, %100, %cst_56 {dimension_numbers = #tpu.dot_dimension_numbers<[1], [0], [0], [1], [0, 0, 1, 1], [], []>} : vector<32x64xbf16>, vector<64x8xbf16>, vector<32x8xf32> -> vector<32x8xf32>
    %c0_57 = arith.constant 0 : index
    %c0_58 = arith.constant 0 : index
    %102 = vector.load %arg9[%c0_57, %c0_58] : memref<1x8xf32, #tpu.memory_space<vmem>>, vector<1x8xf32>
    %103 = vector.broadcast %102 : vector<1x8xf32> to vector<32x8xf32>
    %104 = arith.addf %101, %103 : vector<32x8xf32>
    %c0_59 = arith.constant 0 : index
    %c0_60 = arith.constant 0 : index
    %105 = vector.load %arg10[%c0_59, %c0_60] : memref<64x64xbf16, #tpu.memory_space<vmem>>, vector<64x64xbf16>
    %cst_61 = arith.constant dense<0.000000e+00> : vector<32x64xf32>
    %106 = tpu.matmul %94, %105, %cst_61 {dimension_numbers = #tpu.dot_dimension_numbers<[1], [0], [0], [1], [0, 0, 1, 1], [], []>} : vector<32x64xbf16>, vector<64x64xbf16>, vector<32x64xf32> -> vector<32x64xf32>
    %c0_62 = arith.constant 0 : index
    %c0_63 = arith.constant 0 : index
    %107 = vector.load %arg11[%c0_62, %c0_63] : memref<1x64xf32, #tpu.memory_space<vmem>>, vector<1x64xf32>
    %108 = vector.broadcast %107 : vector<1x64xf32> to vector<32x64xf32>
    %109 = arith.addf %106, %108 : vector<32x64xf32>
    %cst_64 = arith.constant dense<0.000000e+00> : vector<32x32xf32>
    %110 = tpu.matmul %99, %104, %cst_64 {dimension_numbers = #tpu.dot_dimension_numbers<[1], [1], [0], [0], [0, 0, 1, 0], [], []>} : vector<32x8xf32>, vector<32x8xf32>, vector<32x32xf32> -> vector<32x32xf32>
    %cst_65 = arith.constant dense<0xFF800000> : vector<32xf32>
    %111 = vector.multi_reduction <maximumf>, %110, %cst_65 [1] : vector<32x32xf32> to vector<32xf32>
    %112 = vector.shape_cast %111 : vector<32xf32> to vector<32x1xf32>
    %113 = vector.broadcast %112 : vector<32x1xf32> to vector<32x32xf32>
    %114 = arith.subf %110, %113 : vector<32x32xf32>
    %115 = math.exp %114 : vector<32x32xf32>
    %cst_66 = arith.constant dense<0.000000e+00> : vector<32xf32>
    %116 = vector.multi_reduction <add>, %115, %cst_66 [1] : vector<32x32xf32> to vector<32xf32>
    %117 = vector.shape_cast %116 : vector<32xf32> to vector<32x1xf32>
    %118 = arith.truncf %115 : vector<32x32xf32> to vector<32x32xbf16>
    %119 = arith.truncf %109 : vector<32x64xf32> to vector<32x64xbf16>
    %cst_67 = arith.constant dense<0.000000e+00> : vector<32x64xf32>
    %120 = tpu.matmul %118, %119, %cst_67 {dimension_numbers = #tpu.dot_dimension_numbers<[1], [0], [0], [1], [0, 0, 1, 1], [], []>} : vector<32x32xbf16>, vector<32x64xbf16>, vector<32x64xf32> -> vector<32x64xf32>
    %121 = tpu.reciprocal %117 {approx = true} : vector<32x1xf32> -> vector<32x1xf32>
    %122 = vector.broadcast %121 : vector<32x1xf32> to vector<32x64xf32>
    %123 = arith.mulf %120, %122 : vector<32x64xf32>
    %c0_68 = arith.constant 0 : index
    %c0_69 = arith.constant 0 : index
    %124 = memref.load %arg12[%c0_68, %c0_69] : memref<1x1xf32, #tpu.memory_space<smem>>
    %125 = vector.broadcast %124 : f32 to vector<32x64xf32>
    %126 = arith.mulf %125, %123 : vector<32x64xf32>
    %127 = arith.addf %126, %93 : vector<32x64xf32>
    %128 = vector.extract_strided_slice %127 {offsets = [24, 0], sizes = [8, 64], strides = [1, 1]} : vector<32x64xf32> to vector<8x64xf32>
    %c1_i32_70 = arith.constant 1 : i32
    %129 = tpu.dynamic_rotate %128 by %c1_i32_70 dim 0 : vector<8x64xf32>, i32 -> vector<8x64xf32>
    %130 = tpu.iota {dimensions = array<i32: 0>} : vector<8x64xi32>
    %c0_i32_71 = arith.constant 0 : i32
    %131 = vector.broadcast %c0_i32_71 : i32 to vector<8x64xi32>
    %132 = arith.cmpi eq, %130, %131 : vector<8x64xi32>
    %cst_72 = arith.constant 0.000000e+00 : f32
    %133 = vector.broadcast %cst_72 : f32 to vector<8x64xf32>
    %134 = arith.select %132, %133, %129 : vector<8x64xi1>, vector<8x64xf32>
    %135 = vector.extract_strided_slice %127 {offsets = [0, 0], sizes = [24, 64], strides = [1, 1]} : vector<32x64xf32> to vector<24x64xf32>
    %136 = tpu.concatenate %134, %135 in 0 : vector<8x64xf32>, vector<24x64xf32> -> vector<32x64xf32>
    %137 = vector.extract_strided_slice %127 {offsets = [8, 0], sizes = [24, 64], strides = [1, 1]} : vector<32x64xf32> to vector<24x64xf32>
    %138 = vector.extract_strided_slice %127 {offsets = [0, 0], sizes = [8, 64], strides = [1, 1]} : vector<32x64xf32> to vector<8x64xf32>
    %c7_i32_73 = arith.constant 7 : i32
    %139 = tpu.dynamic_rotate %138 by %c7_i32_73 dim 0 : vector<8x64xf32>, i32 -> vector<8x64xf32>
    %140 = tpu.iota {dimensions = array<i32: 0>} : vector<8x64xi32>
    %c7_i32_74 = arith.constant 7 : i32
    %141 = vector.broadcast %c7_i32_74 : i32 to vector<8x64xi32>
    %142 = arith.cmpi eq, %140, %141 : vector<8x64xi32>
    %cst_75 = arith.constant 0.000000e+00 : f32
    %143 = vector.broadcast %cst_75 : f32 to vector<8x64xf32>
    %144 = arith.select %142, %143, %139 : vector<8x64xi1>, vector<8x64xf32>
    %145 = tpu.concatenate %137, %144 in 0 : vector<24x64xf32>, vector<8x64xf32> -> vector<32x64xf32>
    %146 = arith.truncf %127 : vector<32x64xf32> to vector<32x64xbf16>
    %147 = arith.truncf %136 : vector<32x64xf32> to vector<32x64xbf16>
    %148 = arith.truncf %145 : vector<32x64xf32> to vector<32x64xbf16>
    %c0_76 = arith.constant 0 : index
    %c0_77 = arith.constant 0 : index
    %149 = vector.load %arg14[%c0_76, %c0_77] : memref<1x128xf32, #tpu.memory_space<vmem>>, vector<1x128xf32>
    %c1_78 = arith.constant 1 : index
    %c0_79 = arith.constant 0 : index
    %c0_80 = arith.constant 0 : index
    %150 = vector.load %arg13[%c1_78, %c0_79, %c0_80] : memref<4x64x128xbf16, #tpu.memory_space<vmem>>, vector<1x64x128xbf16>
    %151 = vector.shape_cast %150 : vector<1x64x128xbf16> to vector<64x128xbf16>
    %cst_81 = arith.constant dense<0.000000e+00> : vector<32x128xf32>
    %152 = tpu.matmul %146, %151, %cst_81 {dimension_numbers = #tpu.dot_dimension_numbers<[1], [0], [0], [1], [0, 0, 1, 1], [], []>} : vector<32x64xbf16>, vector<64x128xbf16>, vector<32x128xf32> -> vector<32x128xf32>
    %c3_82 = arith.constant 3 : index
    %c0_83 = arith.constant 0 : index
    %c0_84 = arith.constant 0 : index
    %153 = vector.load %arg13[%c3_82, %c0_83, %c0_84] : memref<4x64x128xbf16, #tpu.memory_space<vmem>>, vector<1x64x128xbf16>
    %154 = vector.shape_cast %153 : vector<1x64x128xbf16> to vector<64x128xbf16>
    %cst_85 = arith.constant dense<0.000000e+00> : vector<32x128xf32>
    %155 = tpu.matmul %147, %154, %cst_85 {dimension_numbers = #tpu.dot_dimension_numbers<[1], [0], [0], [1], [0, 0, 1, 1], [], []>} : vector<32x64xbf16>, vector<64x128xbf16>, vector<32x128xf32> -> vector<32x128xf32>
    %156 = arith.addf %152, %155 : vector<32x128xf32>
    %157 = vector.broadcast %149 : vector<1x128xf32> to vector<32x128xf32>
    %158 = arith.addf %156, %157 : vector<32x128xf32>
    %159 = math.tanh %158 : vector<32x128xf32>
    %c0_86 = arith.constant 0 : index
    %c0_87 = arith.constant 0 : index
    %c0_88 = arith.constant 0 : index
    %160 = vector.load %arg13[%c0_86, %c0_87, %c0_88] : memref<4x64x128xbf16, #tpu.memory_space<vmem>>, vector<1x64x128xbf16>
    %161 = vector.shape_cast %160 : vector<1x64x128xbf16> to vector<64x128xbf16>
    %cst_89 = arith.constant dense<0.000000e+00> : vector<32x128xf32>
    %162 = tpu.matmul %148, %161, %cst_89 {dimension_numbers = #tpu.dot_dimension_numbers<[1], [0], [0], [1], [0, 0, 1, 1], [], []>} : vector<32x64xbf16>, vector<64x128xbf16>, vector<32x128xf32> -> vector<32x128xf32>
    %c2_90 = arith.constant 2 : index
    %c0_91 = arith.constant 0 : index
    %c0_92 = arith.constant 0 : index
    %163 = vector.load %arg13[%c2_90, %c0_91, %c0_92] : memref<4x64x128xbf16, #tpu.memory_space<vmem>>, vector<1x64x128xbf16>
    %164 = vector.shape_cast %163 : vector<1x64x128xbf16> to vector<64x128xbf16>
    %cst_93 = arith.constant dense<0.000000e+00> : vector<32x128xf32>
    %165 = tpu.matmul %146, %164, %cst_93 {dimension_numbers = #tpu.dot_dimension_numbers<[1], [0], [0], [1], [0, 0, 1, 1], [], []>} : vector<32x64xbf16>, vector<64x128xbf16>, vector<32x128xf32> -> vector<32x128xf32>
    %166 = arith.addf %162, %165 : vector<32x128xf32>
    %167 = vector.broadcast %149 : vector<1x128xf32> to vector<32x128xf32>
    %168 = arith.addf %166, %167 : vector<32x128xf32>
    %169 = math.tanh %168 : vector<32x128xf32>
    %170 = tpu.concatenate %159, %169 in 1 : vector<32x128xf32>, vector<32x128xf32> -> vector<32x256xf32>
    %c0_94 = arith.constant 0 : index
    %c0_95 = arith.constant 0 : index
    %c0_96 = arith.constant 0 : index
    %171 = vector.load %arg15[%c0_94, %c0_95, %c0_96] : memref<1x32x256xf32, #tpu.memory_space<vmem>>, vector<1x32x256xf32>
    %172 = vector.shape_cast %171 : vector<1x32x256xf32> to vector<32x256xf32>
    %173 = vector.shape_cast %170 : vector<32x256xf32> to vector<1x32x256xf32>
    tpu.vector_store %arg15[%c0_94, %c0_95, %c0_96], %173 {strides = array<i32>} : memref<1x32x256xf32, #tpu.memory_space<vmem>>, vector<1x32x256xf32>,
    return
  }
  func.func @transform_0(%arg0: i32) -> (i32, i32, i32) {
    %c0_i32 = arith.constant 0 : i32
    %c0_i32_0 = arith.constant 0 : i32
    %c0_i32_1 = arith.constant 0 : i32
    return %arg0, %c0_i32, %c0_i32_0 : i32, i32, i32
  }
  func.func @transform_1(%arg0: i32) -> (i32, i32, i32) {
    %c0_i32 = arith.constant 0 : i32
    %c0_i32_0 = arith.constant 0 : i32
    %c0_i32_1 = arith.constant 0 : i32
    %c0_i32_2 = arith.constant 0 : i32
    return %c0_i32, %c0_i32_0, %c0_i32_1 : i32, i32, i32
  }
  func.func @transform_2(%arg0: i32) -> (i32, i32) {
    %c0_i32 = arith.constant 0 : i32
    %c0_i32_0 = arith.constant 0 : i32
    %c0_i32_1 = arith.constant 0 : i32
    return %c0_i32, %c0_i32_0 : i32, i32
  }
  func.func @transform_3(%arg0: i32) -> (i32, i32, i32) {
    %c0_i32 = arith.constant 0 : i32
    %c0_i32_0 = arith.constant 0 : i32
    %c0_i32_1 = arith.constant 0 : i32
    %c0_i32_2 = arith.constant 0 : i32
    return %c0_i32, %c0_i32_0, %c0_i32_1 : i32, i32, i32
  }
  func.func @transform_4(%arg0: i32) -> (i32, i32) {
    %c0_i32 = arith.constant 0 : i32
    %c0_i32_0 = arith.constant 0 : i32
    %c0_i32_1 = arith.constant 0 : i32
    return %c0_i32, %c0_i32_0 : i32, i32
  }
  func.func @transform_5(%arg0: i32) -> (i32, i32) {
    %c0_i32 = arith.constant 0 : i32
    %c0_i32_0 = arith.constant 0 : i32
    %c0_i32_1 = arith.constant 0 : i32
    return %c0_i32, %c0_i32_0 : i32, i32
  }
  func.func @transform_6(%arg0: i32) -> (i32, i32) {
    %c0_i32 = arith.constant 0 : i32
    %c0_i32_0 = arith.constant 0 : i32
    %c0_i32_1 = arith.constant 0 : i32
    return %c0_i32, %c0_i32_0 : i32, i32
  }
  func.func @transform_7(%arg0: i32) -> (i32, i32) {
    %c0_i32 = arith.constant 0 : i32
    %c0_i32_0 = arith.constant 0 : i32
    %c0_i32_1 = arith.constant 0 : i32
    return %c0_i32, %c0_i32_0 : i32, i32
  }
  func.func @transform_8(%arg0: i32) -> (i32, i32) {
    %c0_i32 = arith.constant 0 : i32
    %c0_i32_0 = arith.constant 0 : i32
    %c0_i32_1 = arith.constant 0 : i32
    return %c0_i32, %c0_i32_0 : i32, i32
  }
  func.func @transform_9(%arg0: i32) -> (i32, i32) {
    %c0_i32 = arith.constant 0 : i32
    %c0_i32_0 = arith.constant 0 : i32
    %c0_i32_1 = arith.constant 0 : i32
    return %c0_i32, %c0_i32_0 : i32, i32
  }
  func.func @transform_10(%arg0: i32) -> (i32, i32) {
    %c0_i32 = arith.constant 0 : i32
    %c0_i32_0 = arith.constant 0 : i32
    %c0_i32_1 = arith.constant 0 : i32
    return %c0_i32, %c0_i32_0 : i32, i32
  }
  func.func @transform_11(%arg0: i32) -> (i32, i32) {
    %c0_i32 = arith.constant 0 : i32
    %c0_i32_0 = arith.constant 0 : i32
    %c0_i32_1 = arith.constant 0 : i32
    return %c0_i32, %c0_i32_0 : i32, i32
  }
  func.func @transform_12(%arg0: i32) -> (i32, i32, i32) {
    %c0_i32 = arith.constant 0 : i32
    %c0_i32_0 = arith.constant 0 : i32
    %c0_i32_1 = arith.constant 0 : i32
    %c0_i32_2 = arith.constant 0 : i32
    return %c0_i32, %c0_i32_0, %c0_i32_1 : i32, i32, i32
  }
  func.func @transform_13(%arg0: i32) -> (i32, i32) {
    %c0_i32 = arith.constant 0 : i32
    %c0_i32_0 = arith.constant 0 : i32
    %c0_i32_1 = arith.constant 0 : i32
    return %c0_i32, %c0_i32_0 : i32, i32
  }
  func.func @transform_14(%arg0: i32) -> (i32, i32, i32) {
    %c0_i32 = arith.constant 0 : i32
    %c0_i32_0 = arith.constant 0 : i32
    %c0_i32_1 = arith.constant 0 : i32
    return %arg0, %c0_i32, %c0_i32_0 : i32, i32, i32
  }
}

</mosaic_0001>

<llo_original>
// kernel: tpu_custom_call.1
$region0: #{tpu_custom_call.1}
  #allocation0 [shape = 'u32[]', space=smem, size = 0x4, offset = 0x4, fixed_abs, tag = 'smem constant byte address 0x4 - core index']
  #allocation1 [shape = 'u32[144,128]{1,0:T(1,128)}', space=vmem, size = 0x12000, scoped, tag = 'internal scratch']
  #allocation2 [shape = 'f32[1,1]{1,0:T(1,128)S(6)}', space=smem, size = 0x200, scoped, tag = 'scoped memory for tpu_custom_call.1']
  %s0 = inlined_call_operand.vmem [shape: f32[2,8,256], index: 0, kind: input, shape index: {}]
  %s1 = inlined_call_operand.hbm [shape: bf16[4,256,128], index: 1, kind: input, shape index: {}]
  %s2 = inlined_call_operand.vmem [shape: f32[1,128], index: 2, kind: input, shape index: {}]
  %s3 = inlined_call_operand.vmem [shape: bf16[4,128,64], index: 3, kind: input, shape index: {}]
  %s4 = inlined_call_operand.vmem [shape: f32[1,64], index: 4, kind: input, shape index: {}]
  %s5 = inlined_call_operand.vmem [shape: bf16[64,8], index: 5, kind: input, shape index: {}]
  %s6 = inlined_call_operand.vmem [shape: f32[1,8], index: 6, kind: input, shape index: {}]
  %s7 = inlined_call_operand.vmem [shape: bf16[64,8], index: 7, kind: input, shape index: {}]
  %s8 = inlined_call_operand.vmem [shape: f32[1,8], index: 8, kind: input, shape index: {}]
  %s9 = inlined_call_operand.vmem [shape: bf16[64,64], index: 9, kind: input, shape index: {}]
  %s10 = inlined_call_operand.vmem [shape: f32[1,64], index: 10, kind: input, shape index: {}]
  %s11 = inlined_call_operand.<no memory space> [shape: f32[1,1], index: 11, kind: input, shape index: {}]
  %s12 = inlined_call_operand.vmem [shape: bf16[4,64,128], index: 12, kind: input, shape index: {}]
  %s13 = inlined_call_operand.vmem [shape: f32[1,128], index: 13, kind: input, shape index: {}]
  %s14 = inlined_call_operand.hbm [shape: f32[2,32,256], index: 14, kind: output, shape index: {}]
  %s15 = sld [smem:[#allocation0]]
  $region93: #{tpu_custom_call.1} parent=0
    _
  %s17 = ssub.s32 1, %s15
  %s18 = scalar_select 0, %s17, %s15
  %19 = sst [smem:[#allocation2]] %s11
  $region1: #{tpu_custom_call.1} parent=0
    #allocation3 [shape = 'u8[262144]{0}', space=vmem, size = 0x40000, scoped, tag = 'input window, operand 1, single buffered']
    #allocation4 [shape = 's32[2]{0}', space=sflag, size = 0x8, scoped, tag = 'scoped memory for tpu_custom_call.1']
    #allocation5 [shape = 's32[2]{0}', space=sflag, size = 0x8, scoped, tag = 'scoped memory for tpu_custom_call.1']
    #allocation6 [shape = 'u8[65536]{0}', space=vmem, size = 0x10000, scoped, tag = 'output window, operand 0']
    %20 = vsyncpa [#allocation4], 0
    %21 = vsyncpa [#allocation5], 0
    %s22 = scalar_lea.sflag [#allocation5], 1
    %23 = vsyncpa %s22, 0
    loop: start=0, step=1, limit=4
    $region2: #{tpu_custom_call.1} parent=1 // loop_pre_header
      _
    $region3: #{tpu_custom_call.1} parent=1 // loop_header
      %s25 = sphi 0, %s29
      %p26 = scmp.ge.s32.totalorder %s25, 4
      %s35 = sphi 0, %s37
      %s38 = sphi 0, %s35
      %s39 = sphi 0, %s38
      %s55 = sphi 0, %s39
      %s59 = sphi 0, %s59
      %s61 = sphi 0, %s59
      %s62 = sphi 0, %s61
      %s76 = sphi 0, %s62
      %s80 = sphi 0, %s80
      %s82 = sphi 0, %s80
      %s83 = sphi 0, %s82
      %s97 = sphi 0, %s83
      %s101 = sphi 0, %s101
      %s103 = sphi 0, %s101
      %s104 = sphi 0, %s103
      %s118 = sphi 0, %s104
      %s122 = sphi 0, %s122
      %s124 = sphi 0, %s122
      %s125 = sphi 0, %s124
      %s139 = sphi 0, %s125
      %s143 = sphi 0, %s143
      %s145 = sphi 0, %s143
      %s146 = sphi 0, %s145
      %s160 = sphi 0, %s146
      %s164 = sphi 0, %s164
      %s166 = sphi 0, %s164
      %s167 = sphi 0, %s166
      %s181 = sphi 0, %s167
      %s185 = sphi 0, %s185
      %s187 = sphi 0, %s185
      %s188 = sphi 0, %s187
      %s202 = sphi 0, %s188
      %s206 = sphi 0, %s206
      %s208 = sphi 0, %s206
      %s209 = sphi 0, %s208
      %s223 = sphi 0, %s209
      %s227 = sphi 0, %s227
      %s229 = sphi 0, %s227
      %s230 = sphi 0, %s229
      %s244 = sphi 0, %s230
      %s248 = sphi 0, %s248
      %s250 = sphi 0, %s248
      %s251 = sphi 0, %s250
      %s265 = sphi 0, %s251
      %s269 = sphi 0, %s269
      %s271 = sphi 0, %s269
      %s272 = sphi 0, %s271
      %s286 = sphi 0, %s272
      %s290 = sphi 0, %s290
      %s292 = sphi 0, %s290
      %s293 = sphi 0, %s292
      %s307 = sphi 0, %s293
      %s311 = sphi 0, %s311
      %s313 = sphi 0, %s311
      %s314 = sphi 0, %s313
      %s328 = sphi 0, %s314
      %s334 = sphi 0, %s336
      %s337 = sphi 0, %s334
      %s338 = sphi 0, %s337
      %s354 = sphi 0, %s338
    $region4: #{tpu_custom_call.1} parent=1 // loop_header_branch
      %28 = sbr.rel (%p26) target = $region8
    $region5: #{tpu_custom_call.1} parent=1 // loop_body
      %s30 = ssub.s32 %s25, 1
      %s31 = ssub.s32 %s25, 2
      %s32 = sadd.s32 %s25, 1
      %s33 = ssub.s32 %s25, %s32
      %p34 = scmp.eq.s32.totalorder %s33, 0
      %s36 = sadd.s32 %s35, 1
      %s37 = scalar_select %p34, %s35, %s36
      %p40 = pneg %p34
      %p41 = scmp.eq.s32.totalorder %s25, 1
      %p42 = por %p40, %p41
      %p43 = scmp.ne.s32.totalorder %s35, %s38
      %p44 = scmp.eq.s32.totalorder %s25, 0
      %p45 = por %p43, %p44
      %p46 = scmp.ne.s32.totalorder %s35, %s38
      %p47 = scmp.eq.s32.totalorder %s30, 1
      %p48 = por %p46, %p47
      %p49 = scmp.ne.s32.totalorder %s38, %s39
      %p50 = scmp.eq.s32.totalorder %s30, 0
      %p51 = por %p49, %p50
      %p52 = scmp.ne.s32.totalorder %s38, %s39
      %p53 = scmp.eq.s32.totalorder %s31, 1
      %p54 = por %p52, %p53
      %p56 = scmp.ne.s32.totalorder %s39, %s55
      %p57 = scmp.eq.s32.totalorder %s31, 0
      %p58 = por %p56, %p57
      %s60 = sadd.s32 %s59, 1
      %p63 = scmp.eq.s32.totalorder %s25, 1
      %p64 = scmp.ne.s32.totalorder %s59, %s61
      %p65 = scmp.eq.s32.totalorder %s25, 0
      %p66 = por %p64, %p65
      %p67 = scmp.ne.s32.totalorder %s59, %s61
      %p68 = scmp.eq.s32.totalorder %s30, 1
      %p69 = por %p67, %p68
      %p70 = scmp.ne.s32.totalorder %s61, %s62
      %p71 = scmp.eq.s32.totalorder %s30, 0
      %p72 = por %p70, %p71
      %p73 = scmp.ne.s32.totalorder %s61, %s62
      %p74 = scmp.eq.s32.totalorder %s31, 1
      %p75 = por %p73, %p74
      %p77 = scmp.ne.s32.totalorder %s62, %s76
      %p78 = scmp.eq.s32.totalorder %s31, 0
      %p79 = por %p77, %p78
      %s81 = sadd.s32 %s80, 1
      %p84 = scmp.eq.s32.totalorder %s25, 1
      %p85 = scmp.ne.s32.totalorder %s80, %s82
      %p86 = scmp.eq.s32.totalorder %s25, 0
      %p87 = por %p85, %p86
      %p88 = scmp.ne.s32.totalorder %s80, %s82
      %p89 = scmp.eq.s32.totalorder %s30, 1
      %p90 = por %p88, %p89
      %p91 = scmp.ne.s32.totalorder %s82, %s83
      %p92 = scmp.eq.s32.totalorder %s30, 0
      %p93 = por %p91, %p92
      %p94 = scmp.ne.s32.totalorder %s82, %s83
      %p95 = scmp.eq.s32.totalorder %s31, 1
      %p96 = por %p94, %p95
      %p98 = scmp.ne.s32.totalorder %s83, %s97
      %p99 = scmp.eq.s32.totalorder %s31, 0
      %p100 = por %p98, %p99
      %s102 = sadd.s32 %s101, 1
      %p105 = scmp.eq.s32.totalorder %s25, 1
      %p106 = scmp.ne.s32.totalorder %s101, %s103
      %p107 = scmp.eq.s32.totalorder %s25, 0
      %p108 = por %p106, %p107
      %p109 = scmp.ne.s32.totalorder %s101, %s103
      %p110 = scmp.eq.s32.totalorder %s30, 1
      %p111 = por %p109, %p110
      %p112 = scmp.ne.s32.totalorder %s103, %s104
      %p113 = scmp.eq.s32.totalorder %s30, 0
      %p114 = por %p112, %p113
      %p115 = scmp.ne.s32.totalorder %s103, %s104
      %p116 = scmp.eq.s32.totalorder %s31, 1
      %p117 = por %p115, %p116
      %p119 = scmp.ne.s32.totalorder %s104, %s118
      %p120 = scmp.eq.s32.totalorder %s31, 0
      %p121 = por %p119, %p120
      %s123 = sadd.s32 %s122, 1
      %p126 = scmp.eq.s32.totalorder %s25, 1
      %p127 = scmp.ne.s32.totalorder %s122, %s124
      %p128 = scmp.eq.s32.totalorder %s25, 0
      %p129 = por %p127, %p128
      %p130 = scmp.ne.s32.totalorder %s122, %s124
      %p131 = scmp.eq.s32.totalorder %s30, 1
      %p132 = por %p130, %p131
      %p133 = scmp.ne.s32.totalorder %s124, %s125
      %p134 = scmp.eq.s32.totalorder %s30, 0
      %p135 = por %p133, %p134
      %p136 = scmp.ne.s32.totalorder %s124, %s125
      %p137 = scmp.eq.s32.totalorder %s31, 1
      %p138 = por %p136, %p137
      %p140 = scmp.ne.s32.totalorder %s125, %s139
      %p141 = scmp.eq.s32.totalorder %s31, 0
      %p142 = por %p140, %p141
      %s144 = sadd.s32 %s143, 1
      %p147 = scmp.eq.s32.totalorder %s25, 1
      %p148 = scmp.ne.s32.totalorder %s143, %s145
      %p149 = scmp.eq.s32.totalorder %s25, 0
      %p150 = por %p148, %p149
      %p151 = scmp.ne.s32.totalorder %s143, %s145
      %p152 = scmp.eq.s32.totalorder %s30, 1
      %p153 = por %p151, %p152
      %p154 = scmp.ne.s32.totalorder %s145, %s146
      %p155 = scmp.eq.s32.totalorder %s30, 0
      %p156 = por %p154, %p155
      %p157 = scmp.ne.s32.totalorder %s145, %s146
      %p158 = scmp.eq.s32.totalorder %s31, 1
      %p159 = por %p157, %p158
      %p161 = scmp.ne.s32.totalorder %s146, %s160
      %p162 = scmp.eq.s32.totalorder %s31, 0
      %p163 = por %p161, %p162
      %s165 = sadd.s32 %s164, 1
      %p168 = scmp.eq.s32.totalorder %s25, 1
      %p169 = scmp.ne.s32.totalorder %s164, %s166
      %p170 = scmp.eq.s32.totalorder %s25, 0
      %p171 = por %p169, %p170
      %p172 = scmp.ne.s32.totalorder %s164, %s166
      %p173 = scmp.eq.s32.totalorder %s30, 1
      %p174 = por %p172, %p173
      %p175 = scmp.ne.s32.totalorder %s166, %s167
      %p176 = scmp.eq.s32.totalorder %s30, 0
      %p177 = por %p175, %p176
      %p178 = scmp.ne.s32.totalorder %s166, %s167
      %p179 = scmp.eq.s32.totalorder %s31, 1
      %p180 = por %p178, %p179
      %p182 = scmp.ne.s32.totalorder %s167, %s181
      %p183 = scmp.eq.s32.totalorder %s31, 0
      %p184 = por %p182, %p183
      %s186 = sadd.s32 %s185, 1
      %p189 = scmp.eq.s32.totalorder %s25, 1
      %p190 = scmp.ne.s32.totalorder %s185, %s187
      %p191 = scmp.eq.s32.totalorder %s25, 0
      %p192 = por %p190, %p191
      %p193 = scmp.ne.s32.totalorder %s185, %s187
      %p194 = scmp.eq.s32.totalorder %s30, 1
      %p195 = por %p193, %p194
      %p196 = scmp.ne.s32.totalorder %s187, %s188
      %p197 = scmp.eq.s32.totalorder %s30, 0
      %p198 = por %p196, %p197
      %p199 = scmp.ne.s32.totalorder %s187, %s188
      %p200 = scmp.eq.s32.totalorder %s31, 1
      %p201 = por %p199, %p200
      %p203 = scmp.ne.s32.totalorder %s188, %s202
      %p204 = scmp.eq.s32.totalorder %s31, 0
      %p205 = por %p203, %p204
      %s207 = sadd.s32 %s206, 1
      %p210 = scmp.eq.s32.totalorder %s25, 1
      %p211 = scmp.ne.s32.totalorder %s206, %s208
      %p212 = scmp.eq.s32.totalorder %s25, 0
      %p213 = por %p211, %p212
      %p214 = scmp.ne.s32.totalorder %s206, %s208
      %p215 = scmp.eq.s32.totalorder %s30, 1
      %p216 = por %p214, %p215
      %p217 = scmp.ne.s32.totalorder %s208, %s209
      %p218 = scmp.eq.s32.totalorder %s30, 0
      %p219 = por %p217, %p218
      %p220 = scmp.ne.s32.totalorder %s208, %s209
      %p221 = scmp.eq.s32.totalorder %s31, 1
      %p222 = por %p220, %p221
      %p224 = scmp.ne.s32.totalorder %s209, %s223
      %p225 = scmp.eq.s32.totalorder %s31, 0
      %p226 = por %p224, %p225
      %s228 = sadd.s32 %s227, 1
      %p231 = scmp.eq.s32.totalorder %s25, 1
      %p232 = scmp.ne.s32.totalorder %s227, %s229
      %p233 = scmp.eq.s32.totalorder %s25, 0
      %p234 = por %p232, %p233
      %p235 = scmp.ne.s32.totalorder %s227, %s229
      %p236 = scmp.eq.s32.totalorder %s30, 1
      %p237 = por %p235, %p236
      %p238 = scmp.ne.s32.totalorder %s229, %s230
      %p239 = scmp.eq.s32.totalorder %s30, 0
      %p240 = por %p238, %p239
      %p241 = scmp.ne.s32.totalorder %s229, %s230
      %p242 = scmp.eq.s32.totalorder %s31, 1
      %p243 = por %p241, %p242
      %p245 = scmp.ne.s32.totalorder %s230, %s244
      %p246 = scmp.eq.s32.totalorder %s31, 0
      %p247 = por %p245, %p246
      %s249 = sadd.s32 %s248, 1
      %p252 = scmp.eq.s32.totalorder %s25, 1
      %p253 = scmp.ne.s32.totalorder %s248, %s250
      %p254 = scmp.eq.s32.totalorder %s25, 0
      %p255 = por %p253, %p254
      %p256 = scmp.ne.s32.totalorder %s248, %s250
      %p257 = scmp.eq.s32.totalorder %s30, 1
      %p258 = por %p256, %p257
      %p259 = scmp.ne.s32.totalorder %s250, %s251
      %p260 = scmp.eq.s32.totalorder %s30, 0
      %p261 = por %p259, %p260
      %p262 = scmp.ne.s32.totalorder %s250, %s251
      %p263 = scmp.eq.s32.totalorder %s31, 1
      %p264 = por %p262, %p263
      %p266 = scmp.ne.s32.totalorder %s251, %s265
      %p267 = scmp.eq.s32.totalorder %s31, 0
      %p268 = por %p266, %p267
      %s270 = sadd.s32 %s269, 1
      %p273 = scmp.eq.s32.totalorder %s25, 1
      %p274 = scmp.ne.s32.totalorder %s269, %s271
      %p275 = scmp.eq.s32.totalorder %s25, 0
      %p276 = por %p274, %p275
      %p277 = scmp.ne.s32.totalorder %s269, %s271
      %p278 = scmp.eq.s32.totalorder %s30, 1
      %p279 = por %p277, %p278
      %p280 = scmp.ne.s32.totalorder %s271, %s272
      %p281 = scmp.eq.s32.totalorder %s30, 0
      %p282 = por %p280, %p281
      %p283 = scmp.ne.s32.totalorder %s271, %s272
      %p284 = scmp.eq.s32.totalorder %s31, 1
      %p285 = por %p283, %p284
      %p287 = scmp.ne.s32.totalorder %s272, %s286
      %p288 = scmp.eq.s32.totalorder %s31, 0
      %p289 = por %p287, %p288
      %s291 = sadd.s32 %s290, 1
      %p294 = scmp.eq.s32.totalorder %s25, 1
      %p295 = scmp.ne.s32.totalorder %s290, %s292
      %p296 = scmp.eq.s32.totalorder %s25, 0
      %p297 = por %p295, %p296
      %p298 = scmp.ne.s32.totalorder %s290, %s292
      %p299 = scmp.eq.s32.totalorder %s30, 1
      %p300 = por %p298, %p299
      %p301 = scmp.ne.s32.totalorder %s292, %s293
      %p302 = scmp.eq.s32.totalorder %s30, 0
      %p303 = por %p301, %p302
      %p304 = scmp.ne.s32.totalorder %s292, %s293
      %p305 = scmp.eq.s32.totalorder %s31, 1
      %p306 = por %p304, %p305
      %p308 = scmp.ne.s32.totalorder %s293, %s307
      %p309 = scmp.eq.s32.totalorder %s31, 0
      %p310 = por %p308, %p309
      %s312 = sadd.s32 %s311, 1
      %p315 = scmp.eq.s32.totalorder %s25, 1
      %p316 = scmp.ne.s32.totalorder %s311, %s313
      %p317 = scmp.eq.s32.totalorder %s25, 0
      %p318 = por %p316, %p317
      %p319 = scmp.ne.s32.totalorder %s311, %s313
      %p320 = scmp.eq.s32.totalorder %s30, 1
      %p321 = por %p319, %p320
      %p322 = scmp.ne.s32.totalorder %s313, %s314
      %p323 = scmp.eq.s32.totalorder %s30, 0
      %p324 = por %p322, %p323
      %p325 = scmp.ne.s32.totalorder %s313, %s314
      %p326 = scmp.eq.s32.totalorder %s31, 1
      %p327 = por %p325, %p326
      %p329 = scmp.ne.s32.totalorder %s314, %s328
      %p330 = scmp.eq.s32.totalorder %s31, 0
      %p331 = por %p329, %p330
      %s332 = ssub.s32 %s25, %s32
      %p333 = scmp.eq.s32.totalorder %s332, 0
      %s335 = sadd.s32 %s334, 1
      %s336 = scalar_select %p333, %s334, %s335
      %p339 = pneg %p333
      %p340 = scmp.eq.s32.totalorder %s25, 1
      %p341 = por %p339, %p340
      %p342 = scmp.ne.s32.totalorder %s334, %s337
      %p343 = scmp.eq.s32.totalorder %s25, 0
      %p344 = por %p342, %p343
      %p345 = scmp.ne.s32.totalorder %s334, %s337
      %p346 = scmp.eq.s32.totalorder %s30, 1
      %p347 = por %p345, %p346
      %p348 = scmp.ne.s32.totalorder %s337, %s338
      %p349 = scmp.eq.s32.totalorder %s30, 0
      %p350 = por %p348, %p349
      %p351 = scmp.ne.s32.totalorder %s337, %s338
      %p352 = scmp.eq.s32.totalorder %s31, 1
      %p353 = por %p351, %p352
      %p355 = scmp.ne.s32.totalorder %s338, %s354
      %p356 = scmp.eq.s32.totalorder %s31, 0
      %p357 = por %p355, %p356
      %p358 = scmp.le.s32.totalorder 1, %s25
      %p359 = scmp.lt.s32.totalorder %s25, 3
      %p360 = pnand %p358, %p359
      %p361 = pneg %p360
      // Predicated region
      $region9: #{tpu_custom_call.1} parent=5 // pred_check
        _
      $region10: #{tpu_custom_call.1} parent=5 // pred_check_branch
        %363 = sbr.rel (%p360) target = $region12
      $region11: #{tpu_custom_call.1} parent=5 // pred_region
        %s364 = ssub.s32 %s25, 1
        // Predicated region
        $region13: #{tpu_custom_call.1} parent=11 // pred_check
          %p365 = pneg %p72
        $region14: #{tpu_custom_call.1} parent=11 // pred_check_branch
          %367 = sbr.rel (%p365) target = $region16
        $region15: #{tpu_custom_call.1} parent=11 // pred_region
          %s369 = ssub.s32 8192, 8192
          %370 = vsyncadd [#allocation4], %s369
          %s371 = sshll.u32 [#allocation3], 4
          %s372 = int_to_ptr.vmem [resolvable:$true] %s371
          %377 = dma.hbm_to_vmem [thread:$0]  %s1, 8192, %s372, [#allocation4], 64, 64, 4
        $region16: #{tpu_custom_call.1} parent=11 // pred_fallthru
          _
        // Predicated region
        $region17: #{tpu_custom_call.1} parent=11 // pred_check
          %p378 = pneg %p93
        $region18: #{tpu_custom_call.1} parent=11 // pred_check_branch
          %380 = sbr.rel (%p378) target = $region20
        $region19: #{tpu_custom_call.1} parent=11 // pred_region
          _
        $region20: #{tpu_custom_call.1} parent=11 // pred_fallthru
          _
        // Predicated region
        $region21: #{tpu_custom_call.1} parent=11 // pred_check
          %p381 = pneg %p114
        $region22: #{tpu_custom_call.1} parent=11 // pred_check_branch
          %383 = sbr.rel (%p381) target = $region24
        $region23: #{tpu_custom_call.1} parent=11 // pred_region
          _
        $region24: #{tpu_custom_call.1} parent=11 // pred_fallthru
          _
        // Predicated region
        $region25: #{tpu_custom_call.1} parent=11 // pred_check
          %p384 = pneg %p135
        $region26: #{tpu_custom_call.1} parent=11 // pred_check_branch
          %386 = sbr.rel (%p384) target = $region28
        $region27: #{tpu_custom_call.1} parent=11 // pred_region
          _
        $region28: #{tpu_custom_call.1} parent=11 // pred_fallthru
          _
        // Predicated region
        $region29: #{tpu_custom_call.1} parent=11 // pred_check
          %p387 = pneg %p156
        $region30: #{tpu_custom_call.1} parent=11 // pred_check_branch
          %389 = sbr.rel (%p387) target = $region32
        $region31: #{tpu_custom_call.1} parent=11 // pred_region
          _
        $region32: #{tpu_custom_call.1} parent=11 // pred_fallthru
          _
        // Predicated region
        $region33: #{tpu_custom_call.1} parent=11 // pred_check
          %p390 = pneg %p177
        $region34: #{tpu_custom_call.1} parent=11 // pred_check_branch
          %392 = sbr.rel (%p390) target = $region36
        $region35: #{tpu_custom_call.1} parent=11 // pred_region
          _
        $region36: #{tpu_custom_call.1} parent=11 // pred_fallthru
          _
        // Predicated region
        $region37: #{tpu_custom_call.1} parent=11 // pred_check
          %p393 = pneg %p198
        $region38: #{tpu_custom_call.1} parent=11 // pred_check_branch
          %395 = sbr.rel (%p393) target = $region40
        $region39: #{tpu_custom_call.1} parent=11 // pred_region
          _
        $region40: #{tpu_custom_call.1} parent=11 // pred_fallthru
          _
        // Predicated region
        $region41: #{tpu_custom_call.1} parent=11 // pred_check
          %p396 = pneg %p219
        $region42: #{tpu_custom_call.1} parent=11 // pred_check_branch
          %398 = sbr.rel (%p396) target = $region44
        $region43: #{tpu_custom_call.1} parent=11 // pred_region
          _
        $region44: #{tpu_custom_call.1} parent=11 // pred_fallthru
          _
        // Predicated region
        $region45: #{tpu_custom_call.1} parent=11 // pred_check
          %p399 = pneg %p240
        $region46: #{tpu_custom_call.1} parent=11 // pred_check_branch
          %401 = sbr.rel (%p399) target = $region48
        $region47: #{tpu_custom_call.1} parent=11 // pred_region
          _
        $region48: #{tpu_custom_call.1} parent=11 // pred_fallthru
          _
        // Predicated region
        $region49: #{tpu_custom_call.1} parent=11 // pred_check
          %p402 = pneg %p261
        $region50: #{tpu_custom_call.1} parent=11 // pred_check_branch
          %404 = sbr.rel (%p402) target = $region52
        $region51: #{tpu_custom_call.1} parent=11 // pred_region
          _
        $region52: #{tpu_custom_call.1} parent=11 // pred_fallthru
          _
        // Predicated region
        $region53: #{tpu_custom_call.1} parent=11 // pred_check
          %p405 = pneg %p282
        $region54: #{tpu_custom_call.1} parent=11 // pred_check_branch
          %407 = sbr.rel (%p405) target = $region56
        $region55: #{tpu_custom_call.1} parent=11 // pred_region
          _
        $region56: #{tpu_custom_call.1} parent=11 // pred_fallthru
          _
        // Predicated region
        $region57: #{tpu_custom_call.1} parent=11 // pred_check
          %p408 = pneg %p303
        $region58: #{tpu_custom_call.1} parent=11 // pred_check_branch
          %410 = sbr.rel (%p408) target = $region60
        $region59: #{tpu_custom_call.1} parent=11 // pred_region
          _
        $region60: #{tpu_custom_call.1} parent=11 // pred_fallthru
          _
        // Predicated region
        $region61: #{tpu_custom_call.1} parent=11 // pred_check
          %p411 = pneg %p324
        $region62: #{tpu_custom_call.1} parent=11 // pred_check_branch
          %413 = sbr.rel (%p411) target = $region64
        $region63: #{tpu_custom_call.1} parent=11 // pred_region
          _
        $region64: #{tpu_custom_call.1} parent=11 // pred_fallthru
          _
      $region12: #{tpu_custom_call.1} parent=5 // pred_fallthru
        _
      %p414 = scmp.lt.s32.totalorder %s25, 2
      // Predicated region
      $region65: #{tpu_custom_call.1} parent=5 // pred_check
        %p415 = pneg %p414
      $region66: #{tpu_custom_call.1} parent=5 // pred_check_branch
        %417 = sbr.rel (%p415) target = $region68
      $region67: #{tpu_custom_call.1} parent=5 // pred_region
        // Predicated region
        $region69: #{tpu_custom_call.1} parent=67 // pred_check
          %p418 = pneg %p45
        $region70: #{tpu_custom_call.1} parent=67 // pred_check_branch
          %420 = sbr.rel (%p418) target = $region72
        $region71: #{tpu_custom_call.1} parent=67 // pred_region
          %p421 = scmp.lt.s32.totalorder %s25, 1
          %s422 = scalar_select %p421, %s25, 1
          %s423 = smul.addr %s422, 2
          %s424 = smul.addr %s423, 8
          %s425 = scalar_lea.vmem %s0, %s424
        $region72: #{tpu_custom_call.1} parent=67 // pred_fallthru
          _
      $region68: #{tpu_custom_call.1} parent=5 // pred_fallthru
        _
      %p426 = scmp.le.s32.totalorder 1, %s25
      %p427 = scmp.lt.s32.totalorder %s25, 3
      %p428 = pnand %p426, %p427
      %p429 = pneg %p428
      // Predicated region
      $region73: #{tpu_custom_call.1} parent=5 // pred_check
        _
      $region74: #{tpu_custom_call.1} parent=5 // pred_check_branch
        %431 = sbr.rel (%p428) target = $region76
      $region75: #{tpu_custom_call.1} parent=5 // pred_region
        %s432 = ssub.s32 %s25, 1
        // Predicated region
        $region77: #{tpu_custom_call.1} parent=75 // pred_check
          %p433 = pneg %p72
        $region78: #{tpu_custom_call.1} parent=75 // pred_check_branch
          %435 = sbr.rel (%p433) target = $region80
        $region79: #{tpu_custom_call.1} parent=75 // pred_region
          %436 = dma.done [#allocation4], 8192
        $region80: #{tpu_custom_call.1} parent=75 // pred_fallthru
          _
        %p437 = scmp.lt.s32.totalorder %s30, 1
        %s438 = scalar_select %p437, %s30, 1
        %s439 = smul.addr %s438, 2
        %s440 = smul.addr %s439, 8
        %s441 = scalar_lea.vmem %s0, %s440
        %p442 = pneg %p51
        %p443 = pneg %p48
        %p444 = pneg %p72
        %p445 = pneg %p69
        %p446 = pneg %p93
        %p447 = pneg %p90
        %p448 = pneg %p114
        %p449 = pneg %p111
        %p450 = pneg %p135
        %p451 = pneg %p132
        %p452 = pneg %p156
        %p453 = pneg %p153
        %p454 = pneg %p177
        %p455 = pneg %p174
        %p456 = pneg %p198
        %p457 = pneg %p195
        %p458 = pneg %p219
        %p459 = pneg %p216
        %p460 = pneg %p240
        %p461 = pneg %p237
        %p462 = pneg %p261
        %p463 = pneg %p258
        %p464 = pneg %p282
        %p465 = pneg %p279
        %p466 = pneg %p303
        %p467 = pneg %p300
        %p468 = pneg %p324
        %p469 = pneg %p321
        %p470 = pneg %p350
        %p471 = pneg %p347
        %s472 = sand.u32 %s337, 1
        %s473 = scalar_lea.sflag [#allocation5], %s472
        %s474 = sand.u32 %s337, 1
        %s475 = smul.addr %s474, 64
        %s476 = scalar_lea.vmem [#allocation6], %s475
        %p477 = scmp.lt.s32.totalorder %s30, 1
        %s478 = scalar_select %p477, %s30, 1
        %s479 = smul.addr %s478, 2
        %s480 = smul.addr %s479, 8
        %s481 = scalar_lea.vmem %s0, %s480
        %v483 = vld [vmem:[%s481] sm:$0xff]
        %v484 = vld [vmem:[%s481 + $0x8] sm:$0xff]
        %v485 = vpack.c.bf16 %v483, %v483
        %v486 = vpack.c.bf16 %v484, %v484
        %v487 = vld [vmem:[#allocation3] sm:$0xf]
        %v488 = vld [vmem:[#allocation3 + $0x4] sm:$0xf]
        %v489 = vld [vmem:[#allocation3 + $0x8] sm:$0xf]
        %v490 = vld [vmem:[#allocation3 + $0xc] sm:$0xf]
        %v491 = vld [vmem:[#allocation3 + $0x10] sm:$0xf]
        %v492 = vld [vmem:[#allocation3 + $0x14] sm:$0xf]
        %v493 = vld [vmem:[#allocation3 + $0x18] sm:$0xf]
        %v494 = vld [vmem:[#allocation3 + $0x1c] sm:$0xf]
        %v495 = vld [vmem:[#allocation3 + $0x20] sm:$0xf]
        %v496 = vld [vmem:[#allocation3 + $0x24] sm:$0xf]
        %v497 = vld [vmem:[#allocation3 + $0x28] sm:$0xf]
        %v498 = vld [vmem:[#allocation3 + $0x2c] sm:$0xf]
        %v499 = vld [vmem:[#allocation3 + $0x30] sm:$0xf]
        %v500 = vld [vmem:[#allocation3 + $0x34] sm:$0xf]
        %v501 = vld [vmem:[#allocation3 + $0x38] sm:$0xf]
        %v502 = vld [vmem:[#allocation3 + $0x3c] sm:$0xf]
        %v503 = vld [vmem:[#allocation3 + $0x40] sm:$0xf]
        %v504 = vld [vmem:[#allocation3 + $0x44] sm:$0xf]
        %v505 = vld [vmem:[#allocation3 + $0x48] sm:$0xf]
        %v506 = vld [vmem:[#allocation3 + $0x4c] sm:$0xf]
        %v507 = vld [vmem:[#allocation3 + $0x50] sm:$0xf]
        %v508 = vld [vmem:[#allocation3 + $0x54] sm:$0xf]
        %v509 = vld [vmem:[#allocation3 + $0x58] sm:$0xf]
        %v510 = vld [vmem:[#allocation3 + $0x5c] sm:$0xf]
        %v511 = vld [vmem:[#allocation3 + $0x60] sm:$0xf]
        %v512 = vld [vmem:[#allocation3 + $0x64] sm:$0xf]
        %v513 = vld [vmem:[#allocation3 + $0x68] sm:$0xf]
        %v514 = vld [vmem:[#allocation3 + $0x6c] sm:$0xf]
        %v515 = vld [vmem:[#allocation3 + $0x70] sm:$0xf]
        %v516 = vld [vmem:[#allocation3 + $0x74] sm:$0xf]
        %v517 = vld [vmem:[#allocation3 + $0x78] sm:$0xf]
        %v518 = vld [vmem:[#allocation3 + $0x7c] sm:$0xf]
        %v551 = vunpack.c.l.b16 %v487
        %v552 = vunpack.c.l.b16 %v488
        %v553 = vunpack.c.l.b16 %v489
        %v554 = vunpack.c.l.b16 %v490
        %v555 = vunpack.c.l.b16 %v491
        %v556 = vunpack.c.l.b16 %v492
        %v557 = vunpack.c.l.b16 %v493
        %v558 = vunpack.c.l.b16 %v494
        %v559 = vunpack.c.l.b16 %v495
        %v560 = vunpack.c.l.b16 %v496
        %v561 = vunpack.c.l.b16 %v497
        %v562 = vunpack.c.l.b16 %v498
        %v563 = vunpack.c.l.b16 %v499
        %v564 = vunpack.c.l.b16 %v500
        %v565 = vunpack.c.l.b16 %v501
        %v566 = vunpack.c.l.b16 %v502
        %v567 = vunpack.c.l.b16 %v503
        %v568 = vunpack.c.l.b16 %v504
        %v569 = vunpack.c.l.b16 %v505
        %v570 = vunpack.c.l.b16 %v506
        %v571 = vunpack.c.l.b16 %v507
        %v572 = vunpack.c.l.b16 %v508
        %v573 = vunpack.c.l.b16 %v509
        %v574 = vunpack.c.l.b16 %v510
        %v575 = vunpack.c.l.b16 %v511
        %v576 = vunpack.c.l.b16 %v512
        %v577 = vunpack.c.l.b16 %v513
        %v578 = vunpack.c.l.b16 %v514
        %v579 = vunpack.c.l.b16 %v515
        %v580 = vunpack.c.l.b16 %v516
        %v581 = vunpack.c.l.b16 %v517
        %v582 = vunpack.c.l.b16 %v518
        %v583 = vpack.c.b16 %v552, %v551
        %v584 = vpack.c.b16 %v554, %v553
        %v585 = vpack.c.b16 %v556, %v555
        %v586 = vpack.c.b16 %v558, %v557
        %v587 = vpack.c.b16 %v560, %v559
        %v588 = vpack.c.b16 %v562, %v561
        %v589 = vpack.c.b16 %v564, %v563
        %v590 = vpack.c.b16 %v566, %v565
        %v591 = vpack.c.b16 %v568, %v567
        %v592 = vpack.c.b16 %v570, %v569
        %v593 = vpack.c.b16 %v572, %v571
        %v594 = vpack.c.b16 %v574, %v573
        %v595 = vpack.c.b16 %v576, %v575
        %v596 = vpack.c.b16 %v578, %v577
        %v597 = vpack.c.b16 %v580, %v579
        %v598 = vpack.c.b16 %v582, %v581
        %615 = vmatprep.subr.bf16.mxu0 0
        %616 = vmatpush1.bf16.msra.mxu0 %v590
        %617 = vmatprep.subr.bf16.mxu0 0
        %618 = vmatpush1.bf16.msra.mxu0 %v589
        %619 = vmatprep.subr.bf16.mxu0 0
        %620 = vmatpush1.bf16.msra.mxu0 %v588
        %621 = vmatprep.subr.bf16.mxu0 0
        %622 = vmatpush1.bf16.msra.mxu0 %v587
        %623 = vmatprep.subr.bf16.mxu0 0
        %624 = vmatpush1.bf16.msra.mxu0 %v586
        %625 = vmatprep.subr.bf16.mxu0 0
        %626 = vmatpush1.bf16.msra.mxu0 %v585
        %627 = vmatprep.subr.bf16.mxu0 0
        %628 = vmatpush1.bf16.msra.mxu0 %v584
        %629 = vmatprep.subr.bf16.mxu0 0
        %630 = vmatpush1.bf16.msra.mxu0 %v583
        %631 = vmatprep.subr.bf16.mxu0 0
        %632 = vmatpush2.bf16.msra.mxu0 %v598
        %633 = vmatprep.subr.bf16.mxu0 0
        %634 = vmatpush2.bf16.msra.mxu0 %v597
        %635 = vmatprep.subr.bf16.mxu0 0
        %636 = vmatpush2.bf16.msra.mxu0 %v596
        %637 = vmatprep.subr.bf16.mxu0 0
        %638 = vmatpush2.bf16.msra.mxu0 %v595
        %639 = vmatprep.subr.bf16.mxu0 0
        %640 = vmatpush2.bf16.msra.mxu0 %v594
        %641 = vmatprep.subr.bf16.mxu0 0
        %642 = vmatpush2.bf16.msra.mxu0 %v593
        %643 = vmatprep.subr.bf16.mxu0 0
        %644 = vmatpush2.bf16.msra.mxu0 %v592
        %645 = vmatprep.subr.bf16.mxu0 0
        %646 = vmatpush2.bf16.msra.mxu0 %v591
        %647 = vmatprep.mubr.bf16.mxu0 %v486
        %648 = vmatmul.mubr.bf16.gmra.mxu0 %v485
        %v649 = vpop.f32.mrf.mxu0
        %v650 = vadd.f32 0.0, %v649
        %v651 = vpop.f32.mrf.mxu0
        %v652 = vpop.f32.mrf.mxu0
        %v653 = vpop.f32.mrf.mxu0
        %654 = vdwg.mxu0
        %s655 = scalar_lea.vmem [#allocation3], 128
        %v656 = vld [vmem:[%s655] sm:$0xf]
        %v657 = vld [vmem:[%s655 + $0x4] sm:$0xf]
        %v658 = vld [vmem:[%s655 + $0x8] sm:$0xf]
        %v659 = vld [vmem:[%s655 + $0xc] sm:$0xf]
        %v660 = vld [vmem:[%s655 + $0x10] sm:$0xf]
        %v661 = vld [vmem:[%s655 + $0x14] sm:$0xf]
        %v662 = vld [vmem:[%s655 + $0x18] sm:$0xf]
        %v663 = vld [vmem:[%s655 + $0x1c] sm:$0xf]
        %v664 = vld [vmem:[%s655 + $0x20] sm:$0xf]
        %v665 = vld [vmem:[%s655 + $0x24] sm:$0xf]
        %v666 = vld [vmem:[%s655 + $0x28] sm:$0xf]
        %v667 = vld [vmem:[%s655 + $0x2c] sm:$0xf]
        %v668 = vld [vmem:[%s655 + $0x30] sm:$0xf]
        %v669 = vld [vmem:[%s655 + $0x34] sm:$0xf]
        %v670 = vld [vmem:[%s655 + $0x38] sm:$0xf]
        %v671 = vld [vmem:[%s655 + $0x3c] sm:$0xf]
        %v672 = vld [vmem:[%s655 + $0x40] sm:$0xf]
        %v673 = vld [vmem:[%s655 + $0x44] sm:$0xf]
        %v674 = vld [vmem:[%s655 + $0x48] sm:$0xf]
        %v675 = vld [vmem:[%s655 + $0x4c] sm:$0xf]
        %v676 = vld [vmem:[%s655 + $0x50] sm:$0xf]
        %v677 = vld [vmem:[%s655 + $0x54] sm:$0xf]
        %v678 = vld [vmem:[%s655 + $0x58] sm:$0xf]
        %v679 = vld [vmem:[%s655 + $0x5c] sm:$0xf]
        %v680 = vld [vmem:[%s655 + $0x60] sm:$0xf]
        %v681 = vld [vmem:[%s655 + $0x64] sm:$0xf]
        %v682 = vld [vmem:[%s655 + $0x68] sm:$0xf]
        %v683 = vld [vmem:[%s655 + $0x6c] sm:$0xf]
        %v684 = vld [vmem:[%s655 + $0x70] sm:$0xf]
        %v685 = vld [vmem:[%s655 + $0x74] sm:$0xf]
        %v686 = vld [vmem:[%s655 + $0x78] sm:$0xf]
        %v687 = vld [vmem:[%s655 + $0x7c] sm:$0xf]
        %s688 = scalar_lea.vmem [#allocation3], 256
        %v689 = vld [vmem:[%s688] sm:$0xf]
        %v690 = vld [vmem:[%s688 + $0x4] sm:$0xf]
        %v691 = vld [vmem:[%s688 + $0x8] sm:$0xf]
        %v692 = vld [vmem:[%s688 + $0xc] sm:$0xf]
        %v693 = vld [vmem:[%s688 + $0x10] sm:$0xf]
        %v694 = vld [vmem:[%s688 + $0x14] sm:$0xf]
        %v695 = vld [vmem:[%s688 + $0x18] sm:$0xf]
        %v696 = vld [vmem:[%s688 + $0x1c] sm:$0xf]
        %v697 = vld [vmem:[%s688 + $0x20] sm:$0xf]
        %v698 = vld [vmem:[%s688 + $0x24] sm:$0xf]
        %v699 = vld [vmem:[%s688 + $0x28] sm:$0xf]
        %v700 = vld [vmem:[%s688 + $0x2c] sm:$0xf]
        %v701 = vld [vmem:[%s688 + $0x30] sm:$0xf]
        %v702 = vld [vmem:[%s688 + $0x34] sm:$0xf]
        %v703 = vld [vmem:[%s688 + $0x38] sm:$0xf]
        %v704 = vld [vmem:[%s688 + $0x3c] sm:$0xf]
        %v705 = vld [vmem:[%s688 + $0x40] sm:$0xf]
        %v706 = vld [vmem:[%s688 + $0x44] sm:$0xf]
        %v707 = vld [vmem:[%s688 + $0x48] sm:$0xf]
        %v708 = vld [vmem:[%s688 + $0x4c] sm:$0xf]
        %v709 = vld [vmem:[%s688 + $0x50] sm:$0xf]
        %v710 = vld [vmem:[%s688 + $0x54] sm:$0xf]
        %v711 = vld [vmem:[%s688 + $0x58] sm:$0xf]
        %v712 = vld [vmem:[%s688 + $0x5c] sm:$0xf]
        %v713 = vld [vmem:[%s688 + $0x60] sm:$0xf]
        %v714 = vld [vmem:[%s688 + $0x64] sm:$0xf]
        %v715 = vld [vmem:[%s688 + $0x68] sm:$0xf]
        %v716 = vld [vmem:[%s688 + $0x6c] sm:$0xf]
        %v717 = vld [vmem:[%s688 + $0x70] sm:$0xf]
        %v718 = vld [vmem:[%s688 + $0x74] sm:$0xf]
        %v719 = vld [vmem:[%s688 + $0x78] sm:$0xf]
        %v720 = vld [vmem:[%s688 + $0x7c] sm:$0xf]
        %v753 = vunpack.c.l.b16 %v689
        %v754 = vunpack.c.l.b16 %v690
        %v755 = vunpack.c.l.b16 %v691
        %v756 = vunpack.c.l.b16 %v692
        %v757 = vunpack.c.l.b16 %v693
        %v758 = vunpack.c.l.b16 %v694
        %v759 = vunpack.c.l.b16 %v695
        %v760 = vunpack.c.l.b16 %v696
        %v761 = vunpack.c.l.b16 %v697
        %v762 = vunpack.c.l.b16 %v698
        %v763 = vunpack.c.l.b16 %v699
        %v764 = vunpack.c.l.b16 %v700
        %v765 = vunpack.c.l.b16 %v701
        %v766 = vunpack.c.l.b16 %v702
        %v767 = vunpack.c.l.b16 %v703
        %v768 = vunpack.c.l.b16 %v704
        %v769 = vunpack.c.l.b16 %v705
        %v770 = vunpack.c.l.b16 %v706
        %v771 = vunpack.c.l.b16 %v707
        %v772 = vunpack.c.l.b16 %v708
        %v773 = vunpack.c.l.b16 %v709
        %v774 = vunpack.c.l.b16 %v710
        %v775 = vunpack.c.l.b16 %v711
        %v776 = vunpack.c.l.b16 %v712
        %v777 = vunpack.c.l.b16 %v713
        %v778 = vunpack.c.l.b16 %v714
        %v779 = vunpack.c.l.b16 %v715
        %v780 = vunpack.c.l.b16 %v716
        %v781 = vunpack.c.l.b16 %v717
        %v782 = vunpack.c.l.b16 %v718
        %v783 = vunpack.c.l.b16 %v719
        %v784 = vunpack.c.l.b16 %v720
        %v785 = vpack.c.b16 %v754, %v753
        %v786 = vpack.c.b16 %v756, %v755
        %v787 = vpack.c.b16 %v758, %v757
        %v788 = vpack.c.b16 %v760, %v759
        %v789 = vpack.c.b16 %v762, %v761
        %v790 = vpack.c.b16 %v764, %v763
        %v791 = vpack.c.b16 %v766, %v765
        %v792 = vpack.c.b16 %v768, %v767
        %v793 = vpack.c.b16 %v770, %v769
        %v794 = vpack.c.b16 %v772, %v771
        %v795 = vpack.c.b16 %v774, %v773
        %v796 = vpack.c.b16 %v776, %v775
        %v797 = vpack.c.b16 %v778, %v777
        %v798 = vpack.c.b16 %v780, %v779
        %v799 = vpack.c.b16 %v782, %v781
        %v800 = vpack.c.b16 %v784, %v783
        %817 = vmatprep.subr.bf16.mxu0 0
        %818 = vmatpush1.bf16.msra.mxu0 %v792
        %819 = vmatprep.subr.bf16.mxu0 0
        %820 = vmatpush1.bf16.msra.mxu0 %v791
        %821 = vmatprep.subr.bf16.mxu0 0
        %822 = vmatpush1.bf16.msra.mxu0 %v790
        %823 = vmatprep.subr.bf16.mxu0 0
        %824 = vmatpush1.bf16.msra.mxu0 %v789
        %825 = vmatprep.subr.bf16.mxu0 0
        %826 = vmatpush1.bf16.msra.mxu0 %v788
        %827 = vmatprep.subr.bf16.mxu0 0
        %828 = vmatpush1.bf16.msra.mxu0 %v787
        %829 = vmatprep.subr.bf16.mxu0 0
        %830 = vmatpush1.bf16.msra.mxu0 %v786
        %831 = vmatprep.subr.bf16.mxu0 0
        %832 = vmatpush1.bf16.msra.mxu0 %v785
        %833 = vmatprep.subr.bf16.mxu0 0
        %834 = vmatpush2.bf16.msra.mxu0 %v800
        %835 = vmatprep.subr.bf16.mxu0 0
        %836 = vmatpush2.bf16.msra.mxu0 %v799
        %837 = vmatprep.subr.bf16.mxu0 0
        %838 = vmatpush2.bf16.msra.mxu0 %v798
        %839 = vmatprep.subr.bf16.mxu0 0
        %840 = vmatpush2.bf16.msra.mxu0 %v797
        %841 = vmatprep.subr.bf16.mxu0 0
        %842 = vmatpush2.bf16.msra.mxu0 %v796
        %843 = vmatprep.subr.bf16.mxu0 0
        %844 = vmatpush2.bf16.msra.mxu0 %v795
        %845 = vmatprep.subr.bf16.mxu0 0
        %846 = vmatpush2.bf16.msra.mxu0 %v794
        %847 = vmatprep.subr.bf16.mxu0 0
        %848 = vmatpush2.bf16.msra.mxu0 %v793
        %849 = vmatprep.mubr.bf16.mxu0 %v486
        %850 = vmatmul.mubr.bf16.gmra.mxu0 %v485
        %v851 = vpop.f32.mrf.mxu0
        %v852 = vadd.f32 0.0, %v851
        %v853 = vpop.f32.mrf.mxu0
        %v854 = vpop.f32.mrf.mxu0
        %v855 = vpop.f32.mrf.mxu0
        %856 = vdwg.mxu0
        %s857 = scalar_lea.vmem [#allocation3], 384
        %v858 = vld [vmem:[%s857] sm:$0xf]
        %v859 = vld [vmem:[%s857 + $0x4] sm:$0xf]
        %v860 = vld [vmem:[%s857 + $0x8] sm:$0xf]
        %v861 = vld [vmem:[%s857 + $0xc] sm:$0xf]
        %v862 = vld [vmem:[%s857 + $0x10] sm:$0xf]
        %v863 = vld [vmem:[%s857 + $0x14] sm:$0xf]
        %v864 = vld [vmem:[%s857 + $0x18] sm:$0xf]
        %v865 = vld [vmem:[%s857 + $0x1c] sm:$0xf]
        %v866 = vld [vmem:[%s857 + $0x20] sm:$0xf]
        %v867 = vld [vmem:[%s857 + $0x24] sm:$0xf]
        %v868 = vld [vmem:[%s857 + $0x28] sm:$0xf]
        %v869 = vld [vmem:[%s857 + $0x2c] sm:$0xf]
        %v870 = vld [vmem:[%s857 + $0x30] sm:$0xf]
        %v871 = vld [vmem:[%s857 + $0x34] sm:$0xf]
        %v872 = vld [vmem:[%s857 + $0x38] sm:$0xf]
        %v873 = vld [vmem:[%s857 + $0x3c] sm:$0xf]
        %v874 = vld [vmem:[%s857 + $0x40] sm:$0xf]
        %v875 = vld [vmem:[%s857 + $0x44] sm:$0xf]
        %v876 = vld [vmem:[%s857 + $0x48] sm:$0xf]
        %v877 = vld [vmem:[%s857 + $0x4c] sm:$0xf]
        %v878 = vld [vmem:[%s857 + $0x50] sm:$0xf]
        %v879 = vld [vmem:[%s857 + $0x54] sm:$0xf]
        %v880 = vld [vmem:[%s857 + $0x58] sm:$0xf]
        %v881 = vld [vmem:[%s857 + $0x5c] sm:$0xf]
        %v882 = vld [vmem:[%s857 + $0x60] sm:$0xf]
        %v883 = vld [vmem:[%s857 + $0x64] sm:$0xf]
        %v884 = vld [vmem:[%s857 + $0x68] sm:$0xf]
        %v885 = vld [vmem:[%s857 + $0x6c] sm:$0xf]
        %v886 = vld [vmem:[%s857 + $0x70] sm:$0xf]
        %v887 = vld [vmem:[%s857 + $0x74] sm:$0xf]
        %v888 = vld [vmem:[%s857 + $0x78] sm:$0xf]
        %v889 = vld [vmem:[%s857 + $0x7c] sm:$0xf]
        %v922 = vunpack.c.l.b16 %v858
        %v923 = vunpack.c.l.b16 %v859
        %v924 = vunpack.c.l.b16 %v860
        %v925 = vunpack.c.l.b16 %v861
        %v926 = vunpack.c.l.b16 %v862
        %v927 = vunpack.c.l.b16 %v863
        %v928 = vunpack.c.l.b16 %v864
        %v929 = vunpack.c.l.b16 %v865
        %v930 = vunpack.c.l.b16 %v866
        %v931 = vunpack.c.l.b16 %v867
        %v932 = vunpack.c.l.b16 %v868
        %v933 = vunpack.c.l.b16 %v869
        %v934 = vunpack.c.l.b16 %v870
        %v935 = vunpack.c.l.b16 %v871
        %v936 = vunpack.c.l.b16 %v872
        %v937 = vunpack.c.l.b16 %v873
        %v938 = vunpack.c.l.b16 %v874
        %v939 = vunpack.c.l.b16 %v875
        %v940 = vunpack.c.l.b16 %v876
        %v941 = vunpack.c.l.b16 %v877
        %v942 = vunpack.c.l.b16 %v878
        %v943 = vunpack.c.l.b16 %v879
        %v944 = vunpack.c.l.b16 %v880
        %v945 = vunpack.c.l.b16 %v881
        %v946 = vunpack.c.l.b16 %v882
        %v947 = vunpack.c.l.b16 %v883
        %v948 = vunpack.c.l.b16 %v884
        %v949 = vunpack.c.l.b16 %v885
        %v950 = vunpack.c.l.b16 %v886
        %v951 = vunpack.c.l.b16 %v887
        %v952 = vunpack.c.l.b16 %v888
        %v953 = vunpack.c.l.b16 %v889
        %v954 = vpack.c.b16 %v923, %v922
        %v955 = vpack.c.b16 %v925, %v924
        %v956 = vpack.c.b16 %v927, %v926
        %v957 = vpack.c.b16 %v929, %v928
        %v958 = vpack.c.b16 %v931, %v930
        %v959 = vpack.c.b16 %v933, %v932
        %v960 = vpack.c.b16 %v935, %v934
        %v961 = vpack.c.b16 %v937, %v936
        %v962 = vpack.c.b16 %v939, %v938
        %v963 = vpack.c.b16 %v941, %v940
        %v964 = vpack.c.b16 %v943, %v942
        %v965 = vpack.c.b16 %v945, %v944
        %v966 = vpack.c.b16 %v947, %v946
        %v967 = vpack.c.b16 %v949, %v948
        %v968 = vpack.c.b16 %v951, %v950
        %v969 = vpack.c.b16 %v953, %v952
        %986 = vmatprep.subr.bf16.mxu0 0
        %987 = vmatpush1.bf16.msra.mxu0 %v961
        %988 = vmatprep.subr.bf16.mxu0 0
        %989 = vmatpush1.bf16.msra.mxu0 %v960
        %990 = vmatprep.subr.bf16.mxu0 0
        %991 = vmatpush1.bf16.msra.mxu0 %v959
        %992 = vmatprep.subr.bf16.mxu0 0
        %993 = vmatpush1.bf16.msra.mxu0 %v958
        %994 = vmatprep.subr.bf16.mxu0 0
        %995 = vmatpush1.bf16.msra.mxu0 %v957
        %996 = vmatprep.subr.bf16.mxu0 0
        %997 = vmatpush1.bf16.msra.mxu0 %v956
        %998 = vmatprep.subr.bf16.mxu0 0
        %999 = vmatpush1.bf16.msra.mxu0 %v955
        %1000 = vmatprep.subr.bf16.mxu0 0
        %1001 = vmatpush1.bf16.msra.mxu0 %v954
        %1002 = vmatprep.subr.bf16.mxu0 0
        %1003 = vmatpush2.bf16.msra.mxu0 %v969
        %1004 = vmatprep.subr.bf16.mxu0 0
        %1005 = vmatpush2.bf16.msra.mxu0 %v968
        %1006 = vmatprep.subr.bf16.mxu0 0
        %1007 = vmatpush2.bf16.msra.mxu0 %v967
        %1008 = vmatprep.subr.bf16.mxu0 0
        %1009 = vmatpush2.bf16.msra.mxu0 %v966
        %1010 = vmatprep.subr.bf16.mxu0 0
        %1011 = vmatpush2.bf16.msra.mxu0 %v965
        %1012 = vmatprep.subr.bf16.mxu0 0
        %1013 = vmatpush2.bf16.msra.mxu0 %v964
        %1014 = vmatprep.subr.bf16.mxu0 0
        %1015 = vmatpush2.bf16.msra.mxu0 %v963
        %1016 = vmatprep.subr.bf16.mxu0 0
        %1017 = vmatpush2.bf16.msra.mxu0 %v962
        %1018 = vmatprep.mubr.bf16.mxu0 %v486
        %1019 = vmatmul.mubr.bf16.gmra.mxu0 %v485
        %v1020 = vpop.f32.mrf.mxu0
        %v1021 = vadd.f32 0.0, %v1020
        %v1022 = vpop.f32.mrf.mxu0
        %v1023 = vpop.f32.mrf.mxu0
        %v1024 = vpop.f32.mrf.mxu0
        %1025 = vdwg.mxu0
        %v1026 = vld [vmem:[%s2] sm:$0x1]
        %v1027 = vrot.slane %v1021, 7
        %v1028 = vlaneseq
        %v1029 = vshrl.u32 %v1028, 7
        %vm1030 = vcmp.eq.s32.totalorder %v1029, 0
        %v1031 = vsel %vm1030, 0.0, %v1027
        %v1064 = vunpack.c.l.b16 %v656
        %v1065 = vunpack.c.l.b16 %v657
        %v1066 = vunpack.c.l.b16 %v658
        %v1067 = vunpack.c.l.b16 %v659
        %v1068 = vunpack.c.l.b16 %v660
        %v1069 = vunpack.c.l.b16 %v661
        %v1070 = vunpack.c.l.b16 %v662
        %v1071 = vunpack.c.l.b16 %v663
        %v1072 = vunpack.c.l.b16 %v664
        %v1073 = vunpack.c.l.b16 %v665
        %v1074 = vunpack.c.l.b16 %v666
        %v1075 = vunpack.c.l.b16 %v667
        %v1076 = vunpack.c.l.b16 %v668
        %v1077 = vunpack.c.l.b16 %v669
        %v1078 = vunpack.c.l.b16 %v670
        %v1079 = vunpack.c.l.b16 %v671
        %v1080 = vunpack.c.l.b16 %v672
        %v1081 = vunpack.c.l.b16 %v673
        %v1082 = vunpack.c.l.b16 %v674
        %v1083 = vunpack.c.l.b16 %v675
        %v1084 = vunpack.c.l.b16 %v676
        %v1085 = vunpack.c.l.b16 %v677
        %v1086 = vunpack.c.l.b16 %v678
        %v1087 = vunpack.c.l.b16 %v679
        %v1088 = vunpack.c.l.b16 %v680
        %v1089 = vunpack.c.l.b16 %v681
        %v1090 = vunpack.c.l.b16 %v682
        %v1091 = vunpack.c.l.b16 %v683
        %v1092 = vunpack.c.l.b16 %v684
        %v1093 = vunpack.c.l.b16 %v685
        %v1094 = vunpack.c.l.b16 %v686
        %v1095 = vunpack.c.l.b16 %v687
        %v1096 = vpack.c.b16 %v1065, %v1064
        %v1097 = vpack.c.b16 %v1067, %v1066
        %v1098 = vpack.c.b16 %v1069, %v1068
        %v1099 = vpack.c.b16 %v1071, %v1070
        %v1100 = vpack.c.b16 %v1073, %v1072
        %v1101 = vpack.c.b16 %v1075, %v1074
        %v1102 = vpack.c.b16 %v1077, %v1076
        %v1103 = vpack.c.b16 %v1079, %v1078
        %v1104 = vpack.c.b16 %v1081, %v1080
        %v1105 = vpack.c.b16 %v1083, %v1082
        %v1106 = vpack.c.b16 %v1085, %v1084
        %v1107 = vpack.c.b16 %v1087, %v1086
        %v1108 = vpack.c.b16 %v1089, %v1088
        %v1109 = vpack.c.b16 %v1091, %v1090
        %v1110 = vpack.c.b16 %v1093, %v1092
        %v1111 = vpack.c.b16 %v1095, %v1094
        %1128 = vmatprep.subr.bf16.mxu0 0
        %1129 = vmatpush1.bf16.msra.mxu0 %v1103
        %1130 = vmatprep.subr.bf16.mxu0 0
        %1131 = vmatpush1.bf16.msra.mxu0 %v1102
        %1132 = vmatprep.subr.bf16.mxu0 0
        %1133 = vmatpush1.bf16.msra.mxu0 %v1101
        %1134 = vmatprep.subr.bf16.mxu0 0
        %1135 = vmatpush1.bf16.msra.mxu0 %v1100
        %1136 = vmatprep.subr.bf16.mxu0 0
        %1137 = vmatpush1.bf16.msra.mxu0 %v1099
        %1138 = vmatprep.subr.bf16.mxu0 0
        %1139 = vmatpush1.bf16.msra.mxu0 %v1098
        %1140 = vmatprep.subr.bf16.mxu0 0
        %1141 = vmatpush1.bf16.msra.mxu0 %v1097
        %1142 = vmatprep.subr.bf16.mxu0 0
        %1143 = vmatpush1.bf16.msra.mxu0 %v1096
        %1144 = vmatprep.subr.bf16.mxu0 0
        %1145 = vmatpush2.bf16.msra.mxu0 %v1111
        %1146 = vmatprep.subr.bf16.mxu0 0
        %1147 = vmatpush2.bf16.msra.mxu0 %v1110
        %1148 = vmatprep.subr.bf16.mxu0 0
        %1149 = vmatpush2.bf16.msra.mxu0 %v1109
        %1150 = vmatprep.subr.bf16.mxu0 0
        %1151 = vmatpush2.bf16.msra.mxu0 %v1108
        %1152 = vmatprep.subr.bf16.mxu0 0
        %1153 = vmatpush2.bf16.msra.mxu0 %v1107
        %1154 = vmatprep.subr.bf16.mxu0 0
        %1155 = vmatpush2.bf16.msra.mxu0 %v1106
        %1156 = vmatprep.subr.bf16.mxu0 0
        %1157 = vmatpush2.bf16.msra.mxu0 %v1105
        %1158 = vmatprep.subr.bf16.mxu0 0
        %1159 = vmatpush2.bf16.msra.mxu0 %v1104
        %1160 = vmatprep.mubr.bf16.mxu0 %v486
        %1161 = vmatmul.mubr.bf16.gmra.mxu0 %v485
        %v1162 = vpop.f32.mrf.mxu0
        %v1163 = vadd.f32 %v1031, %v1162
        %v1164 = vpop.f32.mrf.mxu0
        %v1165 = vpop.f32.mrf.mxu0
        %v1166 = vpop.f32.mrf.mxu0
        %1167 = vdwg.mxu0
        %v1169 = vlaneseq
        %v1170 = vshrl.u32 %v1169, 7
        %v1171 = vsub.s32 0, %v1170
        %v1172 = vrot.slane %v1026, %v1171
        %v1174 = vadd.f32 %v1163, %v1172
        %v1175 = vmax.f32 %v1174, 0.0
        %v1176 = vrot.slane %v650, 1
        %vm1177 = vcmp.eq.s32.totalorder %v1029, 7
        %v1178 = vsel %vm1177, 0.0, %v1176
        %v1179 = vadd.f32 %v1178, %v852
        %v1180 = vadd.f32 %v1179, %v1172
        %v1181 = vmax.f32 %v1180, 0.0
        %v1182 = vpack.c.bf16 %v1181, %v1175
        %v1183 = vld [vmem:[%s3] sm:$0xf]
        %v1184 = vld [vmem:[%s3 + $0x4] sm:$0xf]
        %v1185 = vld [vmem:[%s3 + $0x8] sm:$0xf]
        %v1186 = vld [vmem:[%s3 + $0xc] sm:$0xf]
        %v1187 = vld [vmem:[%s3 + $0x10] sm:$0xf]
        %v1188 = vld [vmem:[%s3 + $0x14] sm:$0xf]
        %v1189 = vld [vmem:[%s3 + $0x18] sm:$0xf]
        %v1190 = vld [vmem:[%s3 + $0x1c] sm:$0xf]
        %v1191 = vld [vmem:[%s3 + $0x20] sm:$0xf]
        %v1192 = vld [vmem:[%s3 + $0x24] sm:$0xf]
        %v1193 = vld [vmem:[%s3 + $0x28] sm:$0xf]
        %v1194 = vld [vmem:[%s3 + $0x2c] sm:$0xf]
        %v1195 = vld [vmem:[%s3 + $0x30] sm:$0xf]
        %v1196 = vld [vmem:[%s3 + $0x34] sm:$0xf]
        %v1197 = vld [vmem:[%s3 + $0x38] sm:$0xf]
        %v1198 = vld [vmem:[%s3 + $0x3c] sm:$0xf]
        %v1215 = vunpack.c.l.b16 %v1183
        %v1216 = vunpack.c.l.b16 %v1184
        %v1217 = vunpack.c.l.b16 %v1185
        %v1218 = vunpack.c.l.b16 %v1186
        %v1219 = vunpack.c.l.b16 %v1187
        %v1220 = vunpack.c.l.b16 %v1188
        %v1221 = vunpack.c.l.b16 %v1189
        %v1222 = vunpack.c.l.b16 %v1190
        %v1223 = vunpack.c.l.b16 %v1191
        %v1224 = vunpack.c.l.b16 %v1192
        %v1225 = vunpack.c.l.b16 %v1193
        %v1226 = vunpack.c.l.b16 %v1194
        %v1227 = vunpack.c.l.b16 %v1195
        %v1228 = vunpack.c.l.b16 %v1196
        %v1229 = vunpack.c.l.b16 %v1197
        %v1230 = vunpack.c.l.b16 %v1198
        %v1231 = vpack.c.b16 %v1216, %v1215
        %v1232 = vpack.c.b16 %v1218, %v1217
        %v1233 = vpack.c.b16 %v1220, %v1219
        %v1234 = vpack.c.b16 %v1222, %v1221
        %v1235 = vpack.c.b16 %v1224, %v1223
        %v1236 = vpack.c.b16 %v1226, %v1225
        %v1237 = vpack.c.b16 %v1228, %v1227
        %v1238 = vpack.c.b16 %v1230, %v1229
        %1247 = vmatprep.subr.bf16.mxu0 0
        %1248 = vmatpush1.bf16.msra.mxu0 %v1238
        %1249 = vmatprep.subr.bf16.mxu0 0
        %1250 = vmatpush1.bf16.msra.mxu0 %v1237
        %1251 = vmatprep.subr.bf16.mxu0 0
        %1252 = vmatpush1.bf16.msra.mxu0 %v1236
        %1253 = vmatprep.subr.bf16.mxu0 0
        %1254 = vmatpush1.bf16.msra.mxu0 %v1235
        %1255 = vmatprep.subr.bf16.mxu0 0
        %1256 = vmatpush1.bf16.msra.mxu0 %v1234
        %1257 = vmatprep.subr.bf16.mxu0 0
        %1258 = vmatpush1.bf16.msra.mxu0 %v1233
        %1259 = vmatprep.subr.bf16.mxu0 0
        %1260 = vmatpush1.bf16.msra.mxu0 %v1232
        %1261 = vmatprep.subr.bf16.mxu0 0
        %1262 = vmatpush1.bf16.msra.mxu0 %v1231
        %1263 = vmatprep.subr.bf16.mxu0 0
        %1264 = vmatpush2.bf16.msra.mxu0 0
        %1265 = vmatprep.subr.bf16.mxu0 0
        %1266 = vmatpush2.bf16.msra.mxu0 0
        %1267 = vmatprep.subr.bf16.mxu0 0
        %1268 = vmatpush2.bf16.msra.mxu0 0
        %1269 = vmatprep.subr.bf16.mxu0 0
        %1270 = vmatpush2.bf16.msra.mxu0 0
        %1271 = vmatprep.subr.bf16.mxu0 0
        %1272 = vmatpush2.bf16.msra.mxu0 0
        %1273 = vmatprep.subr.bf16.mxu0 0
        %1274 = vmatpush2.bf16.msra.mxu0 0
        %1275 = vmatprep.subr.bf16.mxu0 0
        %1276 = vmatpush2.bf16.msra.mxu0 0
        %1277 = vmatprep.subr.bf16.mxu0 0
        %1278 = vmatpush2.bf16.msra.mxu0 0
        %1279 = vmatprep.mubr.bf16.mxu0 0
        %1280 = vmatmul.mubr.bf16.gmra.mxu0 %v1182
        %v1281 = vpop.f32.mrf.mxu0
        %v1282 = vadd.f32 0.0, %v1281
        %v1283 = vpop.f32.mrf.mxu0
        %v1284 = vpop.f32.mrf.mxu0
        %v1285 = vadd.f32 0.0, %v1284
        %v1286 = vpop.f32.mrf.mxu0
        %1287 = vdwg.mxu0
        %s1288 = scalar_lea.vmem %s3, 64
        %v1289 = vld [vmem:[%s1288] sm:$0xf]
        %v1290 = vld [vmem:[%s1288 + $0x4] sm:$0xf]
        %v1291 = vld [vmem:[%s1288 + $0x8] sm:$0xf]
        %v1292 = vld [vmem:[%s1288 + $0xc] sm:$0xf]
        %v1293 = vld [vmem:[%s1288 + $0x10] sm:$0xf]
        %v1294 = vld [vmem:[%s1288 + $0x14] sm:$0xf]
        %v1295 = vld [vmem:[%s1288 + $0x18] sm:$0xf]
        %v1296 = vld [vmem:[%s1288 + $0x1c] sm:$0xf]
        %v1297 = vld [vmem:[%s1288 + $0x20] sm:$0xf]
        %v1298 = vld [vmem:[%s1288 + $0x24] sm:$0xf]
        %v1299 = vld [vmem:[%s1288 + $0x28] sm:$0xf]
        %v1300 = vld [vmem:[%s1288 + $0x2c] sm:$0xf]
        %v1301 = vld [vmem:[%s1288 + $0x30] sm:$0xf]
        %v1302 = vld [vmem:[%s1288 + $0x34] sm:$0xf]
        %v1303 = vld [vmem:[%s1288 + $0x38] sm:$0xf]
        %v1304 = vld [vmem:[%s1288 + $0x3c] sm:$0xf]
        %v1321 = vunpack.c.l.b16 %v1289
        %v1322 = vunpack.c.l.b16 %v1290
        %v1323 = vunpack.c.l.b16 %v1291
        %v1324 = vunpack.c.l.b16 %v1292
        %v1325 = vunpack.c.l.b16 %v1293
        %v1326 = vunpack.c.l.b16 %v1294
        %v1327 = vunpack.c.l.b16 %v1295
        %v1328 = vunpack.c.l.b16 %v1296
        %v1329 = vunpack.c.l.b16 %v1297
        %v1330 = vunpack.c.l.b16 %v1298
        %v1331 = vunpack.c.l.b16 %v1299
        %v1332 = vunpack.c.l.b16 %v1300
        %v1333 = vunpack.c.l.b16 %v1301
        %v1334 = vunpack.c.l.b16 %v1302
        %v1335 = vunpack.c.l.b16 %v1303
        %v1336 = vunpack.c.l.b16 %v1304
        %v1337 = vpack.c.b16 %v1322, %v1321
        %v1338 = vpack.c.b16 %v1324, %v1323
        %v1339 = vpack.c.b16 %v1326, %v1325
        %v1340 = vpack.c.b16 %v1328, %v1327
        %v1341 = vpack.c.b16 %v1330, %v1329
        %v1342 = vpack.c.b16 %v1332, %v1331
        %v1343 = vpack.c.b16 %v1334, %v1333
        %v1344 = vpack.c.b16 %v1336, %v1335
        %1353 = vmatprep.subr.bf16.mxu0 0
        %1354 = vmatpush1.bf16.msra.mxu0 %v1344
        %1355 = vmatprep.subr.bf16.mxu0 0
        %1356 = vmatpush1.bf16.msra.mxu0 %v1343
        %1357 = vmatprep.subr.bf16.mxu0 0
        %1358 = vmatpush1.bf16.msra.mxu0 %v1342
        %1359 = vmatprep.subr.bf16.mxu0 0
        %1360 = vmatpush1.bf16.msra.mxu0 %v1341
        %1361 = vmatprep.subr.bf16.mxu0 0
        %1362 = vmatpush1.bf16.msra.mxu0 %v1340
        %1363 = vmatprep.subr.bf16.mxu0 0
        %1364 = vmatpush1.bf16.msra.mxu0 %v1339
        %1365 = vmatprep.subr.bf16.mxu0 0
        %1366 = vmatpush1.bf16.msra.mxu0 %v1338
        %1367 = vmatprep.subr.bf16.mxu0 0
        %1368 = vmatpush1.bf16.msra.mxu0 %v1337
        %1369 = vmatprep.subr.bf16.mxu0 0
        %1370 = vmatpush2.bf16.msra.mxu0 0
        %1371 = vmatprep.subr.bf16.mxu0 0
        %1372 = vmatpush2.bf16.msra.mxu0 0
        %1373 = vmatprep.subr.bf16.mxu0 0
        %1374 = vmatpush2.bf16.msra.mxu0 0
        %1375 = vmatprep.subr.bf16.mxu0 0
        %1376 = vmatpush2.bf16.msra.mxu0 0
        %1377 = vmatprep.subr.bf16.mxu0 0
        %1378 = vmatpush2.bf16.msra.mxu0 0
        %1379 = vmatprep.subr.bf16.mxu0 0
        %1380 = vmatpush2.bf16.msra.mxu0 0
        %1381 = vmatprep.subr.bf16.mxu0 0
        %1382 = vmatpush2.bf16.msra.mxu0 0
        %1383 = vmatprep.subr.bf16.mxu0 0
        %1384 = vmatpush2.bf16.msra.mxu0 0
        %1385 = vmatprep.mubr.bf16.mxu0 0
        %1386 = vmatmul.mubr.bf16.gmra.mxu0 %v1182
        %v1387 = vpop.f32.mrf.mxu0
        %v1388 = vadd.f32 0.0, %v1387
        %v1389 = vpop.f32.mrf.mxu0
        %v1390 = vpop.f32.mrf.mxu0
        %v1391 = vadd.f32 0.0, %v1390
        %v1392 = vpop.f32.mrf.mxu0
        %1393 = vdwg.mxu0
        %s1394 = scalar_lea.vmem %s3, 128
        %v1395 = vld [vmem:[%s1394] sm:$0xf]
        %v1396 = vld [vmem:[%s1394 + $0x4] sm:$0xf]
        %v1397 = vld [vmem:[%s1394 + $0x8] sm:$0xf]
        %v1398 = vld [vmem:[%s1394 + $0xc] sm:$0xf]
        %v1399 = vld [vmem:[%s1394 + $0x10] sm:$0xf]
        %v1400 = vld [vmem:[%s1394 + $0x14] sm:$0xf]
        %v1401 = vld [vmem:[%s1394 + $0x18] sm:$0xf]
        %v1402 = vld [vmem:[%s1394 + $0x1c] sm:$0xf]
        %v1403 = vld [vmem:[%s1394 + $0x20] sm:$0xf]
        %v1404 = vld [vmem:[%s1394 + $0x24] sm:$0xf]
        %v1405 = vld [vmem:[%s1394 + $0x28] sm:$0xf]
        %v1406 = vld [vmem:[%s1394 + $0x2c] sm:$0xf]
        %v1407 = vld [vmem:[%s1394 + $0x30] sm:$0xf]
        %v1408 = vld [vmem:[%s1394 + $0x34] sm:$0xf]
        %v1409 = vld [vmem:[%s1394 + $0x38] sm:$0xf]
        %v1410 = vld [vmem:[%s1394 + $0x3c] sm:$0xf]
        %v1427 = vunpack.c.l.b16 %v1395
        %v1428 = vunpack.c.l.b16 %v1396
        %v1429 = vunpack.c.l.b16 %v1397
        %v1430 = vunpack.c.l.b16 %v1398
        %v1431 = vunpack.c.l.b16 %v1399
        %v1432 = vunpack.c.l.b16 %v1400
        %v1433 = vunpack.c.l.b16 %v1401
        %v1434 = vunpack.c.l.b16 %v1402
        %v1435 = vunpack.c.l.b16 %v1403
        %v1436 = vunpack.c.l.b16 %v1404
        %v1437 = vunpack.c.l.b16 %v1405
        %v1438 = vunpack.c.l.b16 %v1406
        %v1439 = vunpack.c.l.b16 %v1407
        %v1440 = vunpack.c.l.b16 %v1408
        %v1441 = vunpack.c.l.b16 %v1409
        %v1442 = vunpack.c.l.b16 %v1410
        %v1443 = vpack.c.b16 %v1428, %v1427
        %v1444 = vpack.c.b16 %v1430, %v1429
        %v1445 = vpack.c.b16 %v1432, %v1431
        %v1446 = vpack.c.b16 %v1434, %v1433
        %v1447 = vpack.c.b16 %v1436, %v1435
        %v1448 = vpack.c.b16 %v1438, %v1437
        %v1449 = vpack.c.b16 %v1440, %v1439
        %v1450 = vpack.c.b16 %v1442, %v1441
        %1459 = vmatprep.subr.bf16.mxu0 0
        %1460 = vmatpush1.bf16.msra.mxu0 %v1450
        %1461 = vmatprep.subr.bf16.mxu0 0
        %1462 = vmatpush1.bf16.msra.mxu0 %v1449
        %1463 = vmatprep.subr.bf16.mxu0 0
        %1464 = vmatpush1.bf16.msra.mxu0 %v1448
        %1465 = vmatprep.subr.bf16.mxu0 0
        %1466 = vmatpush1.bf16.msra.mxu0 %v1447
        %1467 = vmatprep.subr.bf16.mxu0 0
        %1468 = vmatpush1.bf16.msra.mxu0 %v1446
        %1469 = vmatprep.subr.bf16.mxu0 0
        %1470 = vmatpush1.bf16.msra.mxu0 %v1445
        %1471 = vmatprep.subr.bf16.mxu0 0
        %1472 = vmatpush1.bf16.msra.mxu0 %v1444
        %1473 = vmatprep.subr.bf16.mxu0 0
        %1474 = vmatpush1.bf16.msra.mxu0 %v1443
        %1475 = vmatprep.subr.bf16.mxu0 0
        %1476 = vmatpush2.bf16.msra.mxu0 0
        %1477 = vmatprep.subr.bf16.mxu0 0
        %1478 = vmatpush2.bf16.msra.mxu0 0
        %1479 = vmatprep.subr.bf16.mxu0 0
        %1480 = vmatpush2.bf16.msra.mxu0 0
        %1481 = vmatprep.subr.bf16.mxu0 0
        %1482 = vmatpush2.bf16.msra.mxu0 0
        %1483 = vmatprep.subr.bf16.mxu0 0
        %1484 = vmatpush2.bf16.msra.mxu0 0
        %1485 = vmatprep.subr.bf16.mxu0 0
        %1486 = vmatpush2.bf16.msra.mxu0 0
        %1487 = vmatprep.subr.bf16.mxu0 0
        %1488 = vmatpush2.bf16.msra.mxu0 0
        %1489 = vmatprep.subr.bf16.mxu0 0
        %1490 = vmatpush2.bf16.msra.mxu0 0
        %1491 = vmatprep.mubr.bf16.mxu0 0
        %1492 = vmatmul.mubr.bf16.gmra.mxu0 %v1182
        %v1493 = vpop.f32.mrf.mxu0
        %v1494 = vadd.f32 0.0, %v1493
        %v1495 = vpop.f32.mrf.mxu0
        %v1496 = vpop.f32.mrf.mxu0
        %v1497 = vadd.f32 0.0, %v1496
        %v1498 = vpop.f32.mrf.mxu0
        %1499 = vdwg.mxu0
        %s1500 = scalar_lea.vmem %s3, 192
        %v1501 = vld [vmem:[%s1500] sm:$0xf]
        %v1502 = vld [vmem:[%s1500 + $0x4] sm:$0xf]
        %v1503 = vld [vmem:[%s1500 + $0x8] sm:$0xf]
        %v1504 = vld [vmem:[%s1500 + $0xc] sm:$0xf]
        %v1505 = vld [vmem:[%s1500 + $0x10] sm:$0xf]
        %v1506 = vld [vmem:[%s1500 + $0x14] sm:$0xf]
        %v1507 = vld [vmem:[%s1500 + $0x18] sm:$0xf]
        %v1508 = vld [vmem:[%s1500 + $0x1c] sm:$0xf]
        %v1509 = vld [vmem:[%s1500 + $0x20] sm:$0xf]
        %v1510 = vld [vmem:[%s1500 + $0x24] sm:$0xf]
        %v1511 = vld [vmem:[%s1500 + $0x28] sm:$0xf]
        %v1512 = vld [vmem:[%s1500 + $0x2c] sm:$0xf]
        %v1513 = vld [vmem:[%s1500 + $0x30] sm:$0xf]
        %v1514 = vld [vmem:[%s1500 + $0x34] sm:$0xf]
        %v1515 = vld [vmem:[%s1500 + $0x38] sm:$0xf]
        %v1516 = vld [vmem:[%s1500 + $0x3c] sm:$0xf]
        %v1533 = vunpack.c.l.b16 %v1501
        %v1534 = vunpack.c.l.b16 %v1502
        %v1535 = vunpack.c.l.b16 %v1503
        %v1536 = vunpack.c.l.b16 %v1504
        %v1537 = vunpack.c.l.b16 %v1505
        %v1538 = vunpack.c.l.b16 %v1506
        %v1539 = vunpack.c.l.b16 %v1507
        %v1540 = vunpack.c.l.b16 %v1508
        %v1541 = vunpack.c.l.b16 %v1509
        %v1542 = vunpack.c.l.b16 %v1510
        %v1543 = vunpack.c.l.b16 %v1511
        %v1544 = vunpack.c.l.b16 %v1512
        %v1545 = vunpack.c.l.b16 %v1513
        %v1546 = vunpack.c.l.b16 %v1514
        %v1547 = vunpack.c.l.b16 %v1515
        %v1548 = vunpack.c.l.b16 %v1516
        %v1549 = vpack.c.b16 %v1534, %v1533
        %v1550 = vpack.c.b16 %v1536, %v1535
        %v1551 = vpack.c.b16 %v1538, %v1537
        %v1552 = vpack.c.b16 %v1540, %v1539
        %v1553 = vpack.c.b16 %v1542, %v1541
        %v1554 = vpack.c.b16 %v1544, %v1543
        %v1555 = vpack.c.b16 %v1546, %v1545
        %v1556 = vpack.c.b16 %v1548, %v1547
        %1565 = vmatprep.subr.bf16.mxu0 0
        %1566 = vmatpush1.bf16.msra.mxu0 %v1556
        %1567 = vmatprep.subr.bf16.mxu0 0
        %1568 = vmatpush1.bf16.msra.mxu0 %v1555
        %1569 = vmatprep.subr.bf16.mxu0 0
        %1570 = vmatpush1.bf16.msra.mxu0 %v1554
        %1571 = vmatprep.subr.bf16.mxu0 0
        %1572 = vmatpush1.bf16.msra.mxu0 %v1553
        %1573 = vmatprep.subr.bf16.mxu0 0
        %1574 = vmatpush1.bf16.msra.mxu0 %v1552
        %1575 = vmatprep.subr.bf16.mxu0 0
        %1576 = vmatpush1.bf16.msra.mxu0 %v1551
        %1577 = vmatprep.subr.bf16.mxu0 0
        %1578 = vmatpush1.bf16.msra.mxu0 %v1550
        %1579 = vmatprep.subr.bf16.mxu0 0
        %1580 = vmatpush1.bf16.msra.mxu0 %v1549
        %1581 = vmatprep.subr.bf16.mxu0 0
        %1582 = vmatpush2.bf16.msra.mxu0 0
        %1583 = vmatprep.subr.bf16.mxu0 0
        %1584 = vmatpush2.bf16.msra.mxu0 0
        %1585 = vmatprep.subr.bf16.mxu0 0
        %1586 = vmatpush2.bf16.msra.mxu0 0
        %1587 = vmatprep.subr.bf16.mxu0 0
        %1588 = vmatpush2.bf16.msra.mxu0 0
        %1589 = vmatprep.subr.bf16.mxu0 0
        %1590 = vmatpush2.bf16.msra.mxu0 0
        %1591 = vmatprep.subr.bf16.mxu0 0
        %1592 = vmatpush2.bf16.msra.mxu0 0
        %1593 = vmatprep.subr.bf16.mxu0 0
        %1594 = vmatpush2.bf16.msra.mxu0 0
        %1595 = vmatprep.subr.bf16.mxu0 0
        %1596 = vmatpush2.bf16.msra.mxu0 0
        %1597 = vmatprep.mubr.bf16.mxu0 0
        %1598 = vmatmul.mubr.bf16.gmra.mxu0 %v1182
        %v1599 = vpop.f32.mrf.mxu0
        %v1600 = vadd.f32 0.0, %v1599
        %v1601 = vpop.f32.mrf.mxu0
        %v1602 = vpop.f32.mrf.mxu0
        %v1603 = vadd.f32 0.0, %v1602
        %v1604 = vpop.f32.mrf.mxu0
        %1605 = vdwg.mxu0
        %v1606 = vld [vmem:[%s4] sm:$0x1]
        %v1607 = vrot.slane %v1603, 7
        %v1608 = vsel %vm1030, 0.0, %v1607
        %v1609 = vadd.f32 %v1388, %v1608
        %v1611 = vlaneseq
        %v1612 = vshrl.u32 %v1611, 7
        %v1613 = vsub.s32 0, %v1612
        %v1614 = vrot.slane %v1606, %v1613
        %v1616 = vadd.f32 %v1609, %v1614
        %v1617 = vmax.f32 %v1616, 0.0
        %v1618 = vadd.f32 %v1285, %v1494
        %v1619 = vadd.f32 %v1618, %v1614
        %v1620 = vmax.f32 %v1619, 0.0
        %v1621 = vadd.f32 %v1391, %v1600
        %v1622 = vadd.f32 %v1621, %v1614
        %v1623 = vmax.f32 %v1622, 0.0
        %v1624 = vrot.slane %v1282, 1
        %v1625 = vsel %vm1177, 0.0, %v1624
        %v1626 = vadd.f32 %v1625, %v1497
        %v1627 = vadd.f32 %v1626, %v1614
        %v1628 = vmax.f32 %v1627, 0.0
        %v1629 = vpack.c.bf16 %v1620, %v1617
        %v1630 = vpack.c.bf16 %v1628, %v1623
        %v1631 = vld [vmem:[%s5] sm:$0xf]
        %v1632 = vld [vmem:[%s5 + $0x4] sm:$0xf]
        %v1633 = vld [vmem:[%s5 + $0x8] sm:$0xf]
        %v1634 = vld [vmem:[%s5 + $0xc] sm:$0xf]
        %v1635 = vld [vmem:[%s5 + $0x10] sm:$0xf]
        %v1636 = vld [vmem:[%s5 + $0x14] sm:$0xf]
        %v1637 = vld [vmem:[%s5 + $0x18] sm:$0xf]
        %v1638 = vld [vmem:[%s5 + $0x1c] sm:$0xf]
        %v1639 = vld [vmem:[%s6] sm:$0x1]
        %v1641 = vlaneseq
        %v1642 = vshrl.u32 %v1641, 7
        %v1643 = vsub.s32 0, %v1642
        %v1644 = vrot.slane %v1639, %v1643
        %v1654 = vunpack.c.l.b16 %v1631
        %v1655 = vunpack.c.l.b16 %v1632
        %v1656 = vunpack.c.l.b16 %v1633
        %v1657 = vunpack.c.l.b16 %v1634
        %v1658 = vunpack.c.l.b16 %v1635
        %v1659 = vunpack.c.l.b16 %v1636
        %v1660 = vunpack.c.l.b16 %v1637
        %v1661 = vunpack.c.l.b16 %v1638
        %v1662 = vpack.c.b16 %v1655, %v1654
        %v1663 = vpack.c.b16 %v1657, %v1656
        %v1664 = vpack.c.b16 %v1659, %v1658
        %v1665 = vpack.c.b16 %v1661, %v1660
        %vm1670 = vcmask 523264
        %v1672 = vsel %vm1670, %v1629, 0
        %v1675 = vsel %vm1670, %v1630, 0
        %1677 = vmatprep.subr.bf16.mxu0 0
        %1678 = vmatpush1.bf16.msra.mxu0 0
        %1679 = vmatprep.subr.bf16.mxu0 0
        %1680 = vmatpush1.bf16.msra.mxu0 0
        %1681 = vmatprep.subr.bf16.mxu0 0
        %1682 = vmatpush1.bf16.msra.mxu0 0
        %1683 = vmatprep.subr.bf16.mxu0 0
        %1684 = vmatpush1.bf16.msra.mxu0 0
        %1685 = vmatprep.subr.bf16.mxu0 0
        %1686 = vmatpush1.bf16.msra.mxu0 %v1665
        %1687 = vmatprep.subr.bf16.mxu0 0
        %1688 = vmatpush1.bf16.msra.mxu0 %v1664
        %1689 = vmatprep.subr.bf16.mxu0 0
        %1690 = vmatpush1.bf16.msra.mxu0 %v1663
        %1691 = vmatprep.subr.bf16.mxu0 0
        %1692 = vmatpush1.bf16.msra.mxu0 %v1662
        %1693 = vmatprep.subr.bf16.mxu0 0
        %1694 = vmatpush2.bf16.msra.mxu0 0
        %1695 = vmatprep.subr.bf16.mxu0 0
        %1696 = vmatpush2.bf16.msra.mxu0 0
        %1697 = vmatprep.subr.bf16.mxu0 0
        %1698 = vmatpush2.bf16.msra.mxu0 0
        %1699 = vmatprep.subr.bf16.mxu0 0
        %1700 = vmatpush2.bf16.msra.mxu0 0
        %1701 = vmatprep.subr.bf16.mxu0 0
        %1702 = vmatpush2.bf16.msra.mxu0 0
        %1703 = vmatprep.subr.bf16.mxu0 0
        %1704 = vmatpush2.bf16.msra.mxu0 0
        %1705 = vmatprep.subr.bf16.mxu0 0
        %1706 = vmatpush2.bf16.msra.mxu0 0
        %1707 = vmatprep.subr.bf16.mxu0 0
        %1708 = vmatpush2.bf16.msra.mxu0 0
        %1709 = vmatprep.mubr.bf16.mxu0 0
        %1710 = vmatmul.mubr.bf16.gmra.mxu0 %v1672
        %v1711 = vpop.f32.mrf.mxu0
        %v1712 = vadd.f32 %v1644, %v1711
        %v1713 = vpop.f32.mrf.mxu0
        %v1714 = vpop.f32.mrf.mxu0
        %v1715 = vadd.f32 %v1644, %v1714
        %v1716 = vpop.f32.mrf.mxu0
        %1717 = vmatprep.mubr.bf16.mxu0 0
        %1718 = vmatmul.mubr.bf16.gmra.mxu0 %v1675
        %v1719 = vpop.f32.mrf.mxu0
        %v1720 = vadd.f32 %v1644, %v1719
        %v1721 = vpop.f32.mrf.mxu0
        %v1722 = vpop.f32.mrf.mxu0
        %v1723 = vadd.f32 %v1644, %v1722
        %v1724 = vpop.f32.mrf.mxu0
        %1725 = vdwg.mxu0
        %v1726 = vld [vmem:[%s7] sm:$0xf]
        %v1727 = vld [vmem:[%s7 + $0x4] sm:$0xf]
        %v1728 = vld [vmem:[%s7 + $0x8] sm:$0xf]
        %v1729 = vld [vmem:[%s7 + $0xc] sm:$0xf]
        %v1730 = vld [vmem:[%s7 + $0x10] sm:$0xf]
        %v1731 = vld [vmem:[%s7 + $0x14] sm:$0xf]
        %v1732 = vld [vmem:[%s7 + $0x18] sm:$0xf]
        %v1733 = vld [vmem:[%s7 + $0x1c] sm:$0xf]
        %v1734 = vld [vmem:[%s8] sm:$0x1]
        %v1736 = vlaneseq
        %v1737 = vshrl.u32 %v1736, 7
        %v1738 = vsub.s32 0, %v1737
        %v1739 = vrot.slane %v1734, %v1738
        %v1749 = vunpack.c.l.b16 %v1726
        %v1750 = vunpack.c.l.b16 %v1727
        %v1751 = vunpack.c.l.b16 %v1728
        %v1752 = vunpack.c.l.b16 %v1729
        %v1753 = vunpack.c.l.b16 %v1730
        %v1754 = vunpack.c.l.b16 %v1731
        %v1755 = vunpack.c.l.b16 %v1732
        %v1756 = vunpack.c.l.b16 %v1733
        %v1757 = vpack.c.b16 %v1750, %v1749
        %v1758 = vpack.c.b16 %v1752, %v1751
        %v1759 = vpack.c.b16 %v1754, %v1753
        %v1760 = vpack.c.b16 %v1756, %v1755
        %1765 = vmatprep.subr.bf16.mxu0 0
        %1766 = vmatpush1.bf16.msra.mxu0 0
        %1767 = vmatprep.subr.bf16.mxu0 0
        %1768 = vmatpush1.bf16.msra.mxu0 0
        %1769 = vmatprep.subr.bf16.mxu0 0
        %1770 = vmatpush1.bf16.msra.mxu0 0
        %1771 = vmatprep.subr.bf16.mxu0 0
        %1772 = vmatpush1.bf16.msra.mxu0 0
        %1773 = vmatprep.subr.bf16.mxu0 0
        %1774 = vmatpush1.bf16.msra.mxu0 %v1760
        %1775 = vmatprep.subr.bf16.mxu0 0
        %1776 = vmatpush1.bf16.msra.mxu0 %v1759
        %1777 = vmatprep.subr.bf16.mxu0 0
        %1778 = vmatpush1.bf16.msra.mxu0 %v1758
        %1779 = vmatprep.subr.bf16.mxu0 0
        %1780 = vmatpush1.bf16.msra.mxu0 %v1757
        %1781 = vmatprep.subr.bf16.mxu0 0
        %1782 = vmatpush2.bf16.msra.mxu0 0
        %1783 = vmatprep.subr.bf16.mxu0 0
        %1784 = vmatpush2.bf16.msra.mxu0 0
        %1785 = vmatprep.subr.bf16.mxu0 0
        %1786 = vmatpush2.bf16.msra.mxu0 0
        %1787 = vmatprep.subr.bf16.mxu0 0
        %1788 = vmatpush2.bf16.msra.mxu0 0
        %1789 = vmatprep.subr.bf16.mxu0 0
        %1790 = vmatpush2.bf16.msra.mxu0 0
        %1791 = vmatprep.subr.bf16.mxu0 0
        %1792 = vmatpush2.bf16.msra.mxu0 0
        %1793 = vmatprep.subr.bf16.mxu0 0
        %1794 = vmatpush2.bf16.msra.mxu0 0
        %1795 = vmatprep.subr.bf16.mxu0 0
        %1796 = vmatpush2.bf16.msra.mxu0 0
        %1797 = vmatprep.mubr.bf16.mxu0 0
        %1798 = vmatmul.mubr.bf16.gmra.mxu0 %v1672
        %v1799 = vpop.f32.mrf.mxu0
        %v1800 = vadd.f32 %v1739, %v1799
        %v1801 = vpop.f32.mrf.mxu0
        %v1802 = vpop.f32.mrf.mxu0
        %v1803 = vadd.f32 %v1739, %v1802
        %v1804 = vpop.f32.mrf.mxu0
        %1805 = vmatprep.mubr.bf16.mxu0 0
        %1806 = vmatmul.mubr.bf16.gmra.mxu0 %v1675
        %v1807 = vpop.f32.mrf.mxu0
        %v1808 = vadd.f32 %v1739, %v1807
        %v1809 = vpop.f32.mrf.mxu0
        %v1810 = vpop.f32.mrf.mxu0
        %v1811 = vadd.f32 %v1739, %v1810
        %v1812 = vpop.f32.mrf.mxu0
        %1813 = vdwg.mxu0
        %v1814 = vld [vmem:[%s9] sm:$0xf]
        %v1815 = vld [vmem:[%s9 + $0x4] sm:$0xf]
        %v1816 = vld [vmem:[%s9 + $0x8] sm:$0xf]
        %v1817 = vld [vmem:[%s9 + $0xc] sm:$0xf]
        %v1818 = vld [vmem:[%s9 + $0x10] sm:$0xf]
        %v1819 = vld [vmem:[%s9 + $0x14] sm:$0xf]
        %v1820 = vld [vmem:[%s9 + $0x18] sm:$0xf]
        %v1821 = vld [vmem:[%s9 + $0x1c] sm:$0xf]
        %v1822 = vld [vmem:[%s10] sm:$0x1]
        %v1824 = vlaneseq
        %v1825 = vshrl.u32 %v1824, 7
        %v1826 = vsub.s32 0, %v1825
        %v1827 = vrot.slane %v1822, %v1826
        %v1837 = vunpack.c.l.b16 %v1814
        %v1838 = vunpack.c.l.b16 %v1815
        %v1839 = vunpack.c.l.b16 %v1816
        %v1840 = vunpack.c.l.b16 %v1817
        %v1841 = vunpack.c.l.b16 %v1818
        %v1842 = vunpack.c.l.b16 %v1819
        %v1843 = vunpack.c.l.b16 %v1820
        %v1844 = vunpack.c.l.b16 %v1821
        %v1845 = vpack.c.b16 %v1838, %v1837
        %v1846 = vpack.c.b16 %v1840, %v1839
        %v1847 = vpack.c.b16 %v1842, %v1841
        %v1848 = vpack.c.b16 %v1844, %v1843
        %1853 = vmatprep.subr.bf16.mxu0 0
        %1854 = vmatpush1.bf16.msra.mxu0 0
        %1855 = vmatprep.subr.bf16.mxu0 0
        %1856 = vmatpush1.bf16.msra.mxu0 0
        %1857 = vmatprep.subr.bf16.mxu0 0
        %1858 = vmatpush1.bf16.msra.mxu0 0
        %1859 = vmatprep.subr.bf16.mxu0 0
        %1860 = vmatpush1.bf16.msra.mxu0 0
        %1861 = vmatprep.subr.bf16.mxu0 0
        %1862 = vmatpush1.bf16.msra.mxu0 %v1848
        %1863 = vmatprep.subr.bf16.mxu0 0
        %1864 = vmatpush1.bf16.msra.mxu0 %v1847
        %1865 = vmatprep.subr.bf16.mxu0 0
        %1866 = vmatpush1.bf16.msra.mxu0 %v1846
        %1867 = vmatprep.subr.bf16.mxu0 0
        %1868 = vmatpush1.bf16.msra.mxu0 %v1845
        %1869 = vmatprep.subr.bf16.mxu0 0
        %1870 = vmatpush2.bf16.msra.mxu0 0
        %1871 = vmatprep.subr.bf16.mxu0 0
        %1872 = vmatpush2.bf16.msra.mxu0 0
        %1873 = vmatprep.subr.bf16.mxu0 0
        %1874 = vmatpush2.bf16.msra.mxu0 0
        %1875 = vmatprep.subr.bf16.mxu0 0
        %1876 = vmatpush2.bf16.msra.mxu0 0
        %1877 = vmatprep.subr.bf16.mxu0 0
        %1878 = vmatpush2.bf16.msra.mxu0 0
        %1879 = vmatprep.subr.bf16.mxu0 0
        %1880 = vmatpush2.bf16.msra.mxu0 0
        %1881 = vmatprep.subr.bf16.mxu0 0
        %1882 = vmatpush2.bf16.msra.mxu0 0
        %1883 = vmatprep.subr.bf16.mxu0 0
        %1884 = vmatpush2.bf16.msra.mxu0 0
        %1885 = vmatprep.mubr.bf16.mxu0 0
        %1886 = vmatmul.mubr.bf16.gmra.mxu0 %v1672
        %v1887 = vpop.f32.mrf.mxu0
        %v1888 = vadd.f32 %v1827, %v1887
        %v1889 = vpop.f32.mrf.mxu0
        %v1890 = vpop.f32.mrf.mxu0
        %v1891 = vadd.f32 %v1827, %v1890
        %v1892 = vpop.f32.mrf.mxu0
        %1893 = vmatprep.mubr.bf16.mxu0 0
        %1894 = vmatmul.mubr.bf16.gmra.mxu0 %v1675
        %v1895 = vpop.f32.mrf.mxu0
        %v1896 = vadd.f32 %v1827, %v1895
        %v1897 = vpop.f32.mrf.mxu0
        %v1898 = vpop.f32.mrf.mxu0
        %v1899 = vadd.f32 %v1827, %v1898
        %v1900 = vpop.f32.mrf.mxu0
        %1901 = vdwg.mxu0
        %vm1902 = vcmask 64512
        %v1904 = vsel %vm1902, %v1712, 0
        %v1907 = vsel %vm1902, %v1715, 0
        %v1910 = vsel %vm1902, %v1720, 0
        %v1913 = vsel %vm1902, %v1723, 0
        %v1916 = vsel %vm1902, %v1800, 0
        %v1919 = vsel %vm1902, %v1803, 0
        %v1922 = vsel %vm1902, %v1808, 0
        %v1925 = vsel %vm1902, %v1811, 0
        %1927 = vmatprep.subr.mxu0 0.0
        %1928 = vmatpush1.xpose.msra.mxu0 0.0
        %1929 = vmatprep.subr.mxu0 0.0
        %1930 = vmatpush1.xpose.msra.mxu0 0.0
        %1931 = vmatprep.subr.mxu0 0.0
        %1932 = vmatpush1.xpose.msra.mxu0 0.0
        %1933 = vmatprep.subr.mxu0 0.0
        %1934 = vmatpush1.xpose.msra.mxu0 0.0
        %1935 = vmatprep.subr.mxu0 0.0
        %1936 = vmatpush1.xpose.msra.mxu0 0.0
        %1937 = vmatprep.subr.mxu0 0.0
        %1938 = vmatpush1.xpose.msra.mxu0 0.0
        %1939 = vmatprep.subr.mxu0 0.0
        %1940 = vmatpush1.xpose.msra.mxu0 0.0
        %1941 = vmatprep.subr.mxu0 0.0
        %1942 = vmatpush1.xpose.msra.mxu0 0.0
        %1943 = vmatprep.subr.mxu0 0.0
        %1944 = vmatpush1.xpose.msra.mxu0 0.0
        %1945 = vmatprep.subr.mxu0 0.0
        %1946 = vmatpush1.xpose.msra.mxu0 0.0
        %1947 = vmatprep.subr.mxu0 0.0
        %1948 = vmatpush1.xpose.msra.mxu0 0.0
        %1949 = vmatprep.subr.mxu0 0.0
        %1950 = vmatpush1.xpose.msra.mxu0 0.0
        %1951 = vmatprep.subr.mxu0 0.0
        %1952 = vmatpush1.xpose.msra.mxu0 %v1925
        %1953 = vmatprep.subr.mxu0 0.0
        %1954 = vmatpush1.xpose.msra.mxu0 %v1922
        %1955 = vmatprep.subr.mxu0 0.0
        %1956 = vmatpush1.xpose.msra.mxu0 %v1919
        %1957 = vmatprep.subr.mxu0 0.0
        %1958 = vmatpush1.xpose.msra.mxu0 %v1916
        %1959 = vmatprep.subr.mxu0 0.0
        %1960 = vmatpush2.xpose.msra.mxu0 0.0
        %1961 = vmatprep.subr.mxu0 0.0
        %1962 = vmatpush2.xpose.msra.mxu0 0.0
        %1963 = vmatprep.subr.mxu0 0.0
        %1964 = vmatpush2.xpose.msra.mxu0 0.0
        %1965 = vmatprep.subr.mxu0 0.0
        %1966 = vmatpush2.xpose.msra.mxu0 0.0
        %1967 = vmatprep.subr.mxu0 0.0
        %1968 = vmatpush2.xpose.msra.mxu0 0.0
        %1969 = vmatprep.subr.mxu0 0.0
        %1970 = vmatpush2.xpose.msra.mxu0 0.0
        %1971 = vmatprep.subr.mxu0 0.0
        %1972 = vmatpush2.xpose.msra.mxu0 0.0
        %1973 = vmatprep.subr.mxu0 0.0
        %1974 = vmatpush2.xpose.msra.mxu0 0.0
        %1975 = vmatprep.subr.mxu0 0.0
        %1976 = vmatpush2.xpose.msra.mxu0 0.0
        %1977 = vmatprep.subr.mxu0 0.0
        %1978 = vmatpush2.xpose.msra.mxu0 0.0
        %1979 = vmatprep.subr.mxu0 0.0
        %1980 = vmatpush2.xpose.msra.mxu0 0.0
        %1981 = vmatprep.subr.mxu0 0.0
        %1982 = vmatpush2.xpose.msra.mxu0 0.0
        %1983 = vmatprep.subr.mxu0 0.0
        %1984 = vmatpush2.xpose.msra.mxu0 0.0
        %1985 = vmatprep.subr.mxu0 0.0
        %1986 = vmatpush2.xpose.msra.mxu0 0.0
        %1987 = vmatprep.subr.mxu0 0.0
        %1988 = vmatpush2.xpose.msra.mxu0 0.0
        %1989 = vmatprep.subr.mxu0 0.0
        %1990 = vmatpush2.xpose.msra.mxu0 0.0
        %1991 = vmatprep.mubr.f32.mxu0 0.0
        %1992 = vmatmul.mubr.f32.gmra.mxu0 %v1904
        %v1993 = vpop.f32.mrf.mxu0
        %v1994 = vadd.f32 0.0, %v1993
        %v1995 = vpop.f32.mrf.mxu0
        %1996 = vmatprep.mubr.f32.mxu0 0.0
        %1997 = vmatmul.mubr.f32.gmra.mxu0 %v1907
        %v1998 = vpop.f32.mrf.mxu0
        %v1999 = vadd.f32 0.0, %v1998
        %v2000 = vpop.f32.mrf.mxu0
        %2001 = vmatprep.mubr.f32.mxu0 0.0
        %2002 = vmatmul.mubr.f32.gmra.mxu0 %v1910
        %v2003 = vpop.f32.mrf.mxu0
        %v2004 = vadd.f32 0.0, %v2003
        %v2005 = vpop.f32.mrf.mxu0
        %2006 = vmatprep.mubr.f32.mxu0 0.0
        %2007 = vmatmul.mubr.f32.gmra.mxu0 %v1913
        %v2008 = vpop.f32.mrf.mxu0
        %v2009 = vadd.f32 0.0, %v2008
        %v2010 = vpop.f32.mrf.mxu0
        %2011 = vdwg.mxu0
        %vm2012 = vcmask 261120
        %v2013 = vsel %vm2012, %v1994, -inf
        %2014 = vmax.xlane.f32.xlu0 %v2013
        %v2015 = vpop.xlane.xlu0 %2014
        %v2016 = vsel %vm2012, %v1999, -inf
        %2017 = vmax.xlane.f32.xlu0 %v2016
        %v2018 = vpop.xlane.xlu0 %2017
        %v2019 = vsel %vm2012, %v2004, -inf
        %2020 = vmax.xlane.f32.xlu0 %v2019
        %v2021 = vpop.xlane.xlu0 %2020
        %v2022 = vsel %vm2012, %v2009, -inf
        %2023 = vmax.xlane.f32.xlu0 %v2022
        %v2024 = vpop.xlane.xlu0 %2023
        %v2025 = vsub.f32 %v1994, %v2015
        %v2026 = vsub.f32 %v1999, %v2018
        %v2027 = vsub.f32 %v2004, %v2021
        %v2028 = vsub.f32 %v2009, %v2024
        %v2029 = vmul.f32 %v2025, 1.442695
        %v2030 = vpow.pop %v2029
        %v2031 = vmul.f32 %v2026, 1.442695
        %v2032 = vpow.pop %v2031
        %v2033 = vmul.f32 %v2027, 1.442695
        %v2034 = vpow.pop %v2033
        %v2035 = vmul.f32 %v2028, 1.442695
        %v2036 = vpow.pop %v2035
        %v2037 = vsel %vm2012, %v2030, 0.0
        %2038 = vadd.xlane.f32.xlu0 %v2037
        %v2039 = vpop.xlane.xlu0 %2038
        %v2040 = vsel %vm2012, %v2032, 0.0
        %2041 = vadd.xlane.f32.xlu0 %v2040
        %v2042 = vpop.xlane.xlu0 %2041
        %v2043 = vsel %vm2012, %v2034, 0.0
        %2044 = vadd.xlane.f32.xlu0 %v2043
        %v2045 = vpop.xlane.xlu0 %2044
        %v2046 = vsel %vm2012, %v2036, 0.0
        %2047 = vadd.xlane.f32.xlu0 %v2046
        %v2048 = vpop.xlane.xlu0 %2047
        %v2049 = vpack.c.bf16 %v2032, %v2030
        %v2050 = vpack.c.bf16 %v2036, %v2034
        %v2051 = vpack.c.bf16 %v1891, %v1888
        %v2052 = vpack.c.bf16 %v1899, %v1896
        %v2054 = vsel %vm2012, %v2049, 0
        %v2057 = vsel %vm2012, %v2050, 0
        %2059 = vmatprep.subr.bf16.mxu0 0
        %2060 = vmatpush1.bf16.msra.mxu0 0
        %2061 = vmatprep.subr.bf16.mxu0 0
        %2062 = vmatpush1.bf16.msra.mxu0 0
        %2063 = vmatprep.subr.bf16.mxu0 0
        %2064 = vmatpush1.bf16.msra.mxu0 0
        %2065 = vmatprep.subr.bf16.mxu0 0
        %2066 = vmatpush1.bf16.msra.mxu0 0
        %2067 = vmatprep.subr.bf16.mxu0 0
        %2068 = vmatpush1.bf16.msra.mxu0 0
        %2069 = vmatprep.subr.bf16.mxu0 0
        %2070 = vmatpush1.bf16.msra.mxu0 0
        %2071 = vmatprep.subr.bf16.mxu0 0
        %2072 = vmatpush1.bf16.msra.mxu0 %v2052
        %2073 = vmatprep.subr.bf16.mxu0 0
        %2074 = vmatpush1.bf16.msra.mxu0 %v2051
        %2075 = vmatprep.subr.bf16.mxu0 0
        %2076 = vmatpush2.bf16.msra.mxu0 0
        %2077 = vmatprep.subr.bf16.mxu0 0
        %2078 = vmatpush2.bf16.msra.mxu0 0
        %2079 = vmatprep.subr.bf16.mxu0 0
        %2080 = vmatpush2.bf16.msra.mxu0 0
        %2081 = vmatprep.subr.bf16.mxu0 0
        %2082 = vmatpush2.bf16.msra.mxu0 0
        %2083 = vmatprep.subr.bf16.mxu0 0
        %2084 = vmatpush2.bf16.msra.mxu0 0
        %2085 = vmatprep.subr.bf16.mxu0 0
        %2086 = vmatpush2.bf16.msra.mxu0 0
        %2087 = vmatprep.subr.bf16.mxu0 0
        %2088 = vmatpush2.bf16.msra.mxu0 0
        %2089 = vmatprep.subr.bf16.mxu0 0
        %2090 = vmatpush2.bf16.msra.mxu0 0
        %2091 = vmatprep.mubr.bf16.mxu0 0
        %2092 = vmatmul.mubr.bf16.gmra.mxu0 %v2054
        %v2093 = vpop.f32.mrf.mxu0
        %v2094 = vadd.f32 0.0, %v2093
        %v2095 = vpop.f32.mrf.mxu0
        %v2096 = vpop.f32.mrf.mxu0
        %v2097 = vadd.f32 0.0, %v2096
        %v2098 = vpop.f32.mrf.mxu0
        %2099 = vmatprep.mubr.bf16.mxu0 0
        %2100 = vmatmul.mubr.bf16.gmra.mxu0 %v2057
        %v2101 = vpop.f32.mrf.mxu0
        %v2102 = vadd.f32 0.0, %v2101
        %v2103 = vpop.f32.mrf.mxu0
        %v2104 = vpop.f32.mrf.mxu0
        %v2105 = vadd.f32 0.0, %v2104
        %v2106 = vpop.f32.mrf.mxu0
        %2107 = vdwg.mxu0
        %v2108 = vrcp.pop %v2039
        %v2109 = vrcp.pop %v2042
        %v2110 = vrcp.pop %v2045
        %v2111 = vrcp.pop %v2048
        %v2112 = vmul.f32 %v2094, %v2108
        %v2113 = vmul.f32 %v2097, %v2109
        %v2114 = vmul.f32 %v2102, %v2110
        %v2115 = vmul.f32 %v2105, %v2111
        %s2116 = sld [smem:[#allocation2]]
        %v2117 = vstv %s2116
        %v2118 = vmul.f32 %v2117, %v2112
        %v2119 = vmul.f32 %v2117, %v2113
        %v2120 = vmul.f32 %v2117, %v2114
        %v2121 = vmul.f32 %v2117, %v2115
        %v2122 = vadd.f32 %v2118, %v1617
        %v2123 = vadd.f32 %v2119, %v1620
        %v2124 = vadd.f32 %v2120, %v1623
        %v2125 = vadd.f32 %v2121, %v1628
        %v2126 = vrot.slane %v2125, 7
        %v2127 = vsel %vm1030, 0.0, %v2126
        %v2128 = vrot.slane %v2122, 1
        %v2129 = vsel %vm1177, 0.0, %v2128
        %v2130 = vpack.c.bf16 %v2123, %v2122
        %v2131 = vpack.c.bf16 %v2125, %v2124
        %v2132 = vpack.c.bf16 %v2122, %v2127
        %v2133 = vpack.c.bf16 %v2124, %v2123
        %v2134 = vpack.c.bf16 %v2129, %v2125
        %v2135 = vld [vmem:[%s13] sm:$0x1]
        %s2136 = scalar_lea.vmem %s12, 32
        %v2137 = vld [vmem:[%s2136] sm:$0xf]
        %v2138 = vld [vmem:[%s2136 + $0x4] sm:$0xf]
        %v2139 = vld [vmem:[%s2136 + $0x8] sm:$0xf]
        %v2140 = vld [vmem:[%s2136 + $0xc] sm:$0xf]
        %v2141 = vld [vmem:[%s2136 + $0x10] sm:$0xf]
        %v2142 = vld [vmem:[%s2136 + $0x14] sm:$0xf]
        %v2143 = vld [vmem:[%s2136 + $0x18] sm:$0xf]
        %v2144 = vld [vmem:[%s2136 + $0x1c] sm:$0xf]
        %s2145 = scalar_lea.vmem %s12, 96
        %v2146 = vld [vmem:[%s2145] sm:$0xf]
        %v2147 = vld [vmem:[%s2145 + $0x4] sm:$0xf]
        %v2148 = vld [vmem:[%s2145 + $0x8] sm:$0xf]
        %v2149 = vld [vmem:[%s2145 + $0xc] sm:$0xf]
        %v2150 = vld [vmem:[%s2145 + $0x10] sm:$0xf]
        %v2151 = vld [vmem:[%s2145 + $0x14] sm:$0xf]
        %v2152 = vld [vmem:[%s2145 + $0x18] sm:$0xf]
        %v2153 = vld [vmem:[%s2145 + $0x1c] sm:$0xf]
        %v2162 = vunpack.c.l.b16 %v2146
        %v2163 = vunpack.c.l.b16 %v2147
        %v2164 = vunpack.c.l.b16 %v2148
        %v2165 = vunpack.c.l.b16 %v2149
        %v2166 = vunpack.c.l.b16 %v2150
        %v2167 = vunpack.c.l.b16 %v2151
        %v2168 = vunpack.c.l.b16 %v2152
        %v2169 = vunpack.c.l.b16 %v2153
        %v2170 = vpack.c.b16 %v2163, %v2162
        %v2171 = vpack.c.b16 %v2165, %v2164
        %v2172 = vpack.c.b16 %v2167, %v2166
        %v2173 = vpack.c.b16 %v2169, %v2168
        %v2179 = vsel %vm1670, %v2132, 0
        %v2182 = vsel %vm1670, %v2133, 0
        %2184 = vmatprep.subr.bf16.mxu0 0
        %2185 = vmatpush1.bf16.msra.mxu0 0
        %2186 = vmatprep.subr.bf16.mxu0 0
        %2187 = vmatpush1.bf16.msra.mxu0 0
        %2188 = vmatprep.subr.bf16.mxu0 0
        %2189 = vmatpush1.bf16.msra.mxu0 0
        %2190 = vmatprep.subr.bf16.mxu0 0
        %2191 = vmatpush1.bf16.msra.mxu0 0
        %2192 = vmatprep.subr.bf16.mxu0 0
        %2193 = vmatpush1.bf16.msra.mxu0 %v2173
        %2194 = vmatprep.subr.bf16.mxu0 0
        %2195 = vmatpush1.bf16.msra.mxu0 %v2172
        %2196 = vmatprep.subr.bf16.mxu0 0
        %2197 = vmatpush1.bf16.msra.mxu0 %v2171
        %2198 = vmatprep.subr.bf16.mxu0 0
        %2199 = vmatpush1.bf16.msra.mxu0 %v2170
        %2200 = vmatprep.subr.bf16.mxu0 0
        %2201 = vmatpush2.bf16.msra.mxu0 0
        %2202 = vmatprep.subr.bf16.mxu0 0
        %2203 = vmatpush2.bf16.msra.mxu0 0
        %2204 = vmatprep.subr.bf16.mxu0 0
        %2205 = vmatpush2.bf16.msra.mxu0 0
        %2206 = vmatprep.subr.bf16.mxu0 0
        %2207 = vmatpush2.bf16.msra.mxu0 0
        %2208 = vmatprep.subr.bf16.mxu0 0
        %2209 = vmatpush2.bf16.msra.mxu0 0
        %2210 = vmatprep.subr.bf16.mxu0 0
        %2211 = vmatpush2.bf16.msra.mxu0 0
        %2212 = vmatprep.subr.bf16.mxu0 0
        %2213 = vmatpush2.bf16.msra.mxu0 0
        %2214 = vmatprep.subr.bf16.mxu0 0
        %2215 = vmatpush2.bf16.msra.mxu0 0
        %2216 = vmatprep.mubr.bf16.mxu0 0
        %2217 = vmatmul.mubr.bf16.gmra.mxu0 %v2179
        %v2218 = vpop.f32.mrf.mxu0
        %v2219 = vadd.f32 0.0, %v2218
        %v2220 = vpop.f32.mrf.mxu0
        %v2221 = vpop.f32.mrf.mxu0
        %v2222 = vadd.f32 0.0, %v2221
        %v2223 = vpop.f32.mrf.mxu0
        %2224 = vmatprep.mubr.bf16.mxu0 0
        %2225 = vmatmul.mubr.bf16.gmra.mxu0 %v2182
        %v2226 = vpop.f32.mrf.mxu0
        %v2227 = vadd.f32 0.0, %v2226
        %v2228 = vpop.f32.mrf.mxu0
        %v2229 = vpop.f32.mrf.mxu0
        %v2230 = vadd.f32 0.0, %v2229
        %v2231 = vpop.f32.mrf.mxu0
        %2232 = vdwg.mxu0
        %v2241 = vunpack.c.l.b16 %v2137
        %v2242 = vunpack.c.l.b16 %v2138
        %v2243 = vunpack.c.l.b16 %v2139
        %v2244 = vunpack.c.l.b16 %v2140
        %v2245 = vunpack.c.l.b16 %v2141
        %v2246 = vunpack.c.l.b16 %v2142
        %v2247 = vunpack.c.l.b16 %v2143
        %v2248 = vunpack.c.l.b16 %v2144
        %v2249 = vpack.c.b16 %v2242, %v2241
        %v2250 = vpack.c.b16 %v2244, %v2243
        %v2251 = vpack.c.b16 %v2246, %v2245
        %v2252 = vpack.c.b16 %v2248, %v2247
        %v2258 = vsel %vm1670, %v2130, 0
        %v2261 = vsel %vm1670, %v2131, 0
        %2263 = vmatprep.subr.bf16.mxu0 0
        %2264 = vmatpush1.bf16.msra.mxu0 0
        %2265 = vmatprep.subr.bf16.mxu0 0
        %2266 = vmatpush1.bf16.msra.mxu0 0
        %2267 = vmatprep.subr.bf16.mxu0 0
        %2268 = vmatpush1.bf16.msra.mxu0 0
        %2269 = vmatprep.subr.bf16.mxu0 0
        %2270 = vmatpush1.bf16.msra.mxu0 0
        %2271 = vmatprep.subr.bf16.mxu0 0
        %2272 = vmatpush1.bf16.msra.mxu0 %v2252
        %2273 = vmatprep.subr.bf16.mxu0 0
        %2274 = vmatpush1.bf16.msra.mxu0 %v2251
        %2275 = vmatprep.subr.bf16.mxu0 0
        %2276 = vmatpush1.bf16.msra.mxu0 %v2250
        %2277 = vmatprep.subr.bf16.mxu0 0
        %2278 = vmatpush1.bf16.msra.mxu0 %v2249
        %2279 = vmatprep.subr.bf16.mxu0 0
        %2280 = vmatpush2.bf16.msra.mxu0 0
        %2281 = vmatprep.subr.bf16.mxu0 0
        %2282 = vmatpush2.bf16.msra.mxu0 0
        %2283 = vmatprep.subr.bf16.mxu0 0
        %2284 = vmatpush2.bf16.msra.mxu0 0
        %2285 = vmatprep.subr.bf16.mxu0 0
        %2286 = vmatpush2.bf16.msra.mxu0 0
        %2287 = vmatprep.subr.bf16.mxu0 0
        %2288 = vmatpush2.bf16.msra.mxu0 0
        %2289 = vmatprep.subr.bf16.mxu0 0
        %2290 = vmatpush2.bf16.msra.mxu0 0
        %2291 = vmatprep.subr.bf16.mxu0 0
        %2292 = vmatpush2.bf16.msra.mxu0 0
        %2293 = vmatprep.subr.bf16.mxu0 0
        %2294 = vmatpush2.bf16.msra.mxu0 0
        %2295 = vmatprep.mubr.bf16.mxu0 0
        %2296 = vmatmul.mubr.bf16.gmra.mxu0 %v2258
        %v2297 = vpop.f32.mrf.mxu0
        %v2298 = vadd.f32 %v2219, %v2297
        %v2299 = vpop.f32.mrf.mxu0
        %v2300 = vpop.f32.mrf.mxu0
        %v2301 = vadd.f32 %v2222, %v2300
        %v2302 = vpop.f32.mrf.mxu0
        %2303 = vmatprep.mubr.bf16.mxu0 0
        %2304 = vmatmul.mubr.bf16.gmra.mxu0 %v2261
        %v2305 = vpop.f32.mrf.mxu0
        %v2306 = vadd.f32 %v2227, %v2305
        %v2307 = vpop.f32.mrf.mxu0
        %v2308 = vpop.f32.mrf.mxu0
        %v2309 = vadd.f32 %v2230, %v2308
        %v2310 = vpop.f32.mrf.mxu0
        %2311 = vdwg.mxu0
        %v2313 = vlaneseq
        %v2314 = vshrl.u32 %v2313, 7
        %v2315 = vsub.s32 0, %v2314
        %v2316 = vrot.slane %v2135, %v2315
        %v2318 = vadd.f32 %v2298, %v2316
        %v2319 = vadd.f32 %v2301, %v2316
        %v2320 = vadd.f32 %v2306, %v2316
        %v2321 = vadd.f32 %v2309, %v2316
        %v2322 = vtanh.pop %v2318
        %v2323 = vtanh.pop %v2319
        %v2324 = vtanh.pop %v2320
        %v2325 = vtanh.pop %v2321
        %v2326 = vld [vmem:[%s12] sm:$0xf]
        %v2327 = vld [vmem:[%s12 + $0x4] sm:$0xf]
        %v2328 = vld [vmem:[%s12 + $0x8] sm:$0xf]
        %v2329 = vld [vmem:[%s12 + $0xc] sm:$0xf]
        %v2330 = vld [vmem:[%s12 + $0x10] sm:$0xf]
        %v2331 = vld [vmem:[%s12 + $0x14] sm:$0xf]
        %v2332 = vld [vmem:[%s12 + $0x18] sm:$0xf]
        %v2333 = vld [vmem:[%s12 + $0x1c] sm:$0xf]
        %s2334 = scalar_lea.vmem %s12, 64
        %v2335 = vld [vmem:[%s2334] sm:$0xf]
        %v2336 = vld [vmem:[%s2334 + $0x4] sm:$0xf]
        %v2337 = vld [vmem:[%s2334 + $0x8] sm:$0xf]
        %v2338 = vld [vmem:[%s2334 + $0xc] sm:$0xf]
        %v2339 = vld [vmem:[%s2334 + $0x10] sm:$0xf]
        %v2340 = vld [vmem:[%s2334 + $0x14] sm:$0xf]
        %v2341 = vld [vmem:[%s2334 + $0x18] sm:$0xf]
        %v2342 = vld [vmem:[%s2334 + $0x1c] sm:$0xf]
        %v2351 = vunpack.c.l.b16 %v2335
        %v2352 = vunpack.c.l.b16 %v2336
        %v2353 = vunpack.c.l.b16 %v2337
        %v2354 = vunpack.c.l.b16 %v2338
        %v2355 = vunpack.c.l.b16 %v2339
        %v2356 = vunpack.c.l.b16 %v2340
        %v2357 = vunpack.c.l.b16 %v2341
        %v2358 = vunpack.c.l.b16 %v2342
        %v2359 = vpack.c.b16 %v2352, %v2351
        %v2360 = vpack.c.b16 %v2354, %v2353
        %v2361 = vpack.c.b16 %v2356, %v2355
        %v2362 = vpack.c.b16 %v2358, %v2357
        %2367 = vmatprep.subr.bf16.mxu0 0
        %2368 = vmatpush1.bf16.msra.mxu0 0
        %2369 = vmatprep.subr.bf16.mxu0 0
        %2370 = vmatpush1.bf16.msra.mxu0 0
        %2371 = vmatprep.subr.bf16.mxu0 0
        %2372 = vmatpush1.bf16.msra.mxu0 0
        %2373 = vmatprep.subr.bf16.mxu0 0
        %2374 = vmatpush1.bf16.msra.mxu0 0
        %2375 = vmatprep.subr.bf16.mxu0 0
        %2376 = vmatpush1.bf16.msra.mxu0 %v2362
        %2377 = vmatprep.subr.bf16.mxu0 0
        %2378 = vmatpush1.bf16.msra.mxu0 %v2361
        %2379 = vmatprep.subr.bf16.mxu0 0
        %2380 = vmatpush1.bf16.msra.mxu0 %v2360
        %2381 = vmatprep.subr.bf16.mxu0 0
        %2382 = vmatpush1.bf16.msra.mxu0 %v2359
        %2383 = vmatprep.subr.bf16.mxu0 0
        %2384 = vmatpush2.bf16.msra.mxu0 0
        %2385 = vmatprep.subr.bf16.mxu0 0
        %2386 = vmatpush2.bf16.msra.mxu0 0
        %2387 = vmatprep.subr.bf16.mxu0 0
        %2388 = vmatpush2.bf16.msra.mxu0 0
        %2389 = vmatprep.subr.bf16.mxu0 0
        %2390 = vmatpush2.bf16.msra.mxu0 0
        %2391 = vmatprep.subr.bf16.mxu0 0
        %2392 = vmatpush2.bf16.msra.mxu0 0
        %2393 = vmatprep.subr.bf16.mxu0 0
        %2394 = vmatpush2.bf16.msra.mxu0 0
        %2395 = vmatprep.subr.bf16.mxu0 0
        %2396 = vmatpush2.bf16.msra.mxu0 0
        %2397 = vmatprep.subr.bf16.mxu0 0
        %2398 = vmatpush2.bf16.msra.mxu0 0
        %2399 = vmatprep.mubr.bf16.mxu0 0
        %2400 = vmatmul.mubr.bf16.gmra.mxu0 %v2258
        %v2401 = vpop.f32.mrf.mxu0
        %v2402 = vadd.f32 0.0, %v2401
        %v2403 = vpop.f32.mrf.mxu0
        %v2404 = vpop.f32.mrf.mxu0
        %v2405 = vadd.f32 0.0, %v2404
        %v2406 = vpop.f32.mrf.mxu0
        %2407 = vmatprep.mubr.bf16.mxu0 0
        %2408 = vmatmul.mubr.bf16.gmra.mxu0 %v2261
        %v2409 = vpop.f32.mrf.mxu0
        %v2410 = vadd.f32 0.0, %v2409
        %v2411 = vpop.f32.mrf.mxu0
        %v2412 = vpop.f32.mrf.mxu0
        %v2413 = vadd.f32 0.0, %v2412
        %v2414 = vpop.f32.mrf.mxu0
        %2415 = vdwg.mxu0
        %v2424 = vunpack.c.l.b16 %v2326
        %v2425 = vunpack.c.l.b16 %v2327
        %v2426 = vunpack.c.l.b16 %v2328
        %v2427 = vunpack.c.l.b16 %v2329
        %v2428 = vunpack.c.l.b16 %v2330
        %v2429 = vunpack.c.l.b16 %v2331
        %v2430 = vunpack.c.l.b16 %v2332
        %v2431 = vunpack.c.l.b16 %v2333
        %v2432 = vpack.c.b16 %v2425, %v2424
        %v2433 = vpack.c.b16 %v2427, %v2426
        %v2434 = vpack.c.b16 %v2429, %v2428
        %v2435 = vpack.c.b16 %v2431, %v2430
        %v2441 = vsel %vm1670, %v2134, 0
        %2443 = vmatprep.subr.bf16.mxu0 0
        %2444 = vmatpush1.bf16.msra.mxu0 0
        %2445 = vmatprep.subr.bf16.mxu0 0
        %2446 = vmatpush1.bf16.msra.mxu0 0
        %2447 = vmatprep.subr.bf16.mxu0 0
        %2448 = vmatpush1.bf16.msra.mxu0 0
        %2449 = vmatprep.subr.bf16.mxu0 0
        %2450 = vmatpush1.bf16.msra.mxu0 0
        %2451 = vmatprep.subr.bf16.mxu0 0
        %2452 = vmatpush1.bf16.msra.mxu0 %v2435
        %2453 = vmatprep.subr.bf16.mxu0 0
        %2454 = vmatpush1.bf16.msra.mxu0 %v2434
        %2455 = vmatprep.subr.bf16.mxu0 0
        %2456 = vmatpush1.bf16.msra.mxu0 %v2433
        %2457 = vmatprep.subr.bf16.mxu0 0
        %2458 = vmatpush1.bf16.msra.mxu0 %v2432
        %2459 = vmatprep.subr.bf16.mxu0 0
        %2460 = vmatpush2.bf16.msra.mxu0 0
        %2461 = vmatprep.subr.bf16.mxu0 0
        %2462 = vmatpush2.bf16.msra.mxu0 0
        %2463 = vmatprep.subr.bf16.mxu0 0
        %2464 = vmatpush2.bf16.msra.mxu0 0
        %2465 = vmatprep.subr.bf16.mxu0 0
        %2466 = vmatpush2.bf16.msra.mxu0 0
        %2467 = vmatprep.subr.bf16.mxu0 0
        %2468 = vmatpush2.bf16.msra.mxu0 0
        %2469 = vmatprep.subr.bf16.mxu0 0
        %2470 = vmatpush2.bf16.msra.mxu0 0
        %2471 = vmatprep.subr.bf16.mxu0 0
        %2472 = vmatpush2.bf16.msra.mxu0 0
        %2473 = vmatprep.subr.bf16.mxu0 0
        %2474 = vmatpush2.bf16.msra.mxu0 0
        %2475 = vmatprep.mubr.bf16.mxu0 0
        %2476 = vmatmul.mubr.bf16.gmra.mxu0 %v2182
        %v2477 = vpop.f32.mrf.mxu0
        %v2478 = vadd.f32 %v2402, %v2477
        %v2479 = vpop.f32.mrf.mxu0
        %v2480 = vpop.f32.mrf.mxu0
        %v2481 = vadd.f32 %v2405, %v2480
        %v2482 = vpop.f32.mrf.mxu0
        %2483 = vmatprep.mubr.bf16.mxu0 0
        %2484 = vmatmul.mubr.bf16.gmra.mxu0 %v2441
        %v2485 = vpop.f32.mrf.mxu0
        %v2486 = vadd.f32 %v2410, %v2485
        %v2487 = vpop.f32.mrf.mxu0
        %v2488 = vpop.f32.mrf.mxu0
        %v2489 = vadd.f32 %v2413, %v2488
        %v2490 = vpop.f32.mrf.mxu0
        %2491 = vdwg.mxu0
        %v2492 = vadd.f32 %v2478, %v2316
        %v2493 = vadd.f32 %v2481, %v2316
        %v2494 = vadd.f32 %v2486, %v2316
        %v2495 = vadd.f32 %v2489, %v2316
        %v2496 = vtanh.pop %v2492
        %v2497 = vtanh.pop %v2493
        %v2498 = vtanh.pop %v2494
        %v2499 = vtanh.pop %v2495
        %2500 = vst [vmem:[%s476] sm:$0xff] %v2322
        %2501 = vst [vmem:[%s476 + $0x8] sm:$0xff] %v2496
        %2502 = vst [vmem:[%s476 + $0x10] sm:$0xff] %v2323
        %2503 = vst [vmem:[%s476 + $0x18] sm:$0xff] %v2497
        %2504 = vst [vmem:[%s476 + $0x20] sm:$0xff] %v2324
        %2505 = vst [vmem:[%s476 + $0x28] sm:$0xff] %v2498
        %2506 = vst [vmem:[%s476 + $0x30] sm:$0xff] %v2325
        %2507 = vst [vmem:[%s476 + $0x38] sm:$0xff] %v2499
        %s2508 = sand.u32 %s337, 1
        %s2509 = scalar_lea.sflag [#allocation5], %s2508
        %s2510 = sand.u32 %s337, 1
        %s2511 = smul.addr %s2510, 64
        %s2512 = scalar_lea.vmem [#allocation6], %s2511
        // Predicated region
        $region81: #{tpu_custom_call.1} parent=75 // pred_check
          %p2513 = pneg %p347
        $region82: #{tpu_custom_call.1} parent=75 // pred_check_branch
          %2515 = sbr.rel (%p2513) target = $region84
        $region83: #{tpu_custom_call.1} parent=75 // pred_region
          %s2517 = ssub.s32 1024, 1024
          %2518 = vsyncadd %s2509, %s2517
          %s2519 = smul.addr %s30, 8
          %s2520 = smul.addr %s2519, 128
          %s2521 = scalar_lea.hbm %s14, %s2520
          %s2522 = sshll.u32 %s2512, 4
          %s2523 = int_to_ptr.vmem [resolvable:$true] %s2522
          %2528 = dma.vmem_to_hbm [thread:$0]  %s2523, 1024, %s2521, %s2509, 256, 256, 16
        $region84: #{tpu_custom_call.1} parent=75 // pred_fallthru
          _
      $region76: #{tpu_custom_call.1} parent=5 // pred_fallthru
        _
      %p2529 = scmp.le.s32.totalorder 2, %s25
      // Predicated region
      $region85: #{tpu_custom_call.1} parent=5 // pred_check
        %p2530 = pneg %p2529
      $region86: #{tpu_custom_call.1} parent=5 // pred_check_branch
        %2532 = sbr.rel (%p2530) target = $region88
      $region87: #{tpu_custom_call.1} parent=5 // pred_region
        %s2533 = ssub.s32 %s25, 2
        // Predicated region
        $region89: #{tpu_custom_call.1} parent=87 // pred_check
          %p2534 = pneg %p353
        $region90: #{tpu_custom_call.1} parent=87 // pred_check_branch
          %2536 = sbr.rel (%p2534) target = $region92
        $region91: #{tpu_custom_call.1} parent=87 // pred_region
          %s2537 = sand.u32 %s338, 1
          %s2538 = scalar_lea.sflag [#allocation5], %s2537
          %s2539 = sand.u32 %s338, 1
          %s2540 = smul.addr %s2539, 64
          %s2541 = scalar_lea.vmem [#allocation6], %s2540
          %2542 = dma.done %s2538, 1024
        $region92: #{tpu_custom_call.1} parent=87 // pred_fallthru
          _
      $region88: #{tpu_custom_call.1} parent=5 // pred_fallthru
        _
    $region6: #{tpu_custom_call.1} parent=1 // loop_footer
      %s29 = sadd.s32 1, %s25
    $region7: #{tpu_custom_call.1} parent=1 // loop_footer_branch
      %24 = sbr.rel target = $region3
    $region8: #{tpu_custom_call.1} parent=1 // loop_exit
      _
    %2543 = vsyncpa [#allocation4], 1
    %s2544 = scalar_lea.sflag [#allocation4], 1
    %2545 = vsyncpa %s2544, 1
    %2546 = vsyncpa [#allocation5], 1
    %s2547 = scalar_lea.sflag [#allocation5], 1
    %2548 = vsyncpa %s2547, 1

</llo_original>
